<compile_context>
chip_gen: v7x
topology: tpu7x:2x2x1
jax: 0.10.0
libtpu: 0.0.40
codegen_flags: <defaults>
</compile_context>

<pallas_src>
import functools

import jax
import jax.numpy as jnp
from jax import lax
from jax.experimental import pallas as pl
from jax.experimental.pallas import tpu as pltpu

EPS = 1e-5  # nn.BatchNorm2d default eps


# ---------------------------------------------------------------------------
# Kernel
# ---------------------------------------------------------------------------
def rdb_kernel(num_convs, rdb, W, matmul_dtype,
               x_ref, masks_ref, w3_ref, gb_ref, w1_ref, b1_ref, out_ref):
    C0, NHW = x_ref.shape
    inv_cnt = 1.0 / float(NHW)

    x = x_ref[...]                 # (C0, NHW) f32: first dense segment + residual
    masks = masks_ref[...]         # (9, NHW) matmul_dtype {0,1} boundary masks
    w3 = w3_ref[...]               # (num_convs, rdb, 9*num_convs*rdb) matmul_dtype
    gb = gb_ref[...]               # (rdb, 2*num_convs) f32: gamma0,beta0,gamma1,...
    w1 = w1_ref[...]               # (Co, (num_convs+1)*rdb) matmul_dtype
    b1 = b1_ref[...]               # (Co, 1) f32

    def tap_stack(seg_md):
        # 9 taps of a 3x3 SAME conv on a channels-first (rdb, NHW) slab:
        # lane-axis roll (XLU slot) + destination-position boundary mask.
        pieces = []
        t = 0
        for dy in range(3):
            for dx in range(3):
                off = (dy - 1) * W + (dx - 1)           # source = dest + off
                rolled = seg_md if off == 0 else pltpu.roll(
                    seg_md, shift=(-off) % NHW, axis=1)
                pieces.append(rolled * masks[t:t + 1, :])
                t += 1
        return jnp.concatenate(pieces, axis=0)          # (9*rdb, NHW)

    x_md = x.astype(matmul_dtype)      # cast once; used for taps and the 1x1 concat
    feat = x_md                        # running dense channel concat (for the 1x1)
    stack = tap_stack(x_md)            # running 9-tap stack (for the 3x3 convs)

    for i in range(num_convs):
        k_i = 9 * (i + 1) * rdb
        # 3x3 conv over the whole dense concat as ONE K-packed MXU matmul.
        acc = jnp.dot(w3[i, :, :k_i], stack,
                      preferred_element_type=jnp.float32)       # (rdb, NHW) f32
        # Conv bias intentionally omitted: train-mode BN subtracts the batch
        # mean right after, so a per-channel bias cancels exactly.

        # Fused train-mode BatchNorm (biased batch stats over N,H,W) + ReLU,
        # two-pass (centered) variance, all in f32.
        mean = jnp.sum(acc, axis=1, keepdims=True) * inv_cnt     # (rdb, 1)
        cen = acc - mean
        var = jnp.sum(cen * cen, axis=1, keepdims=True) * inv_cnt
        scale = gb[:, 2 * i:2 * i + 1] * lax.rsqrt(var + EPS)    # EUP rsqrt
        out = jnp.maximum(cen * scale + gb[:, 2 * i + 1:2 * i + 2], 0.0)

        seg_md = out.astype(matmul_dtype)      # cast once per segment
        feat = jnp.concatenate([feat, seg_md], axis=0)
        if i + 1 < num_convs:
            stack = jnp.concatenate([stack, tap_stack(seg_md)], axis=0)

    # Final 1x1 conv over the dense concat: ONE (Co, total_C) x (total_C, NHW)
    # matmul, then ReLU + residual add, all lane-dense (Co, NHW).
    z = jnp.dot(w1, feat, preferred_element_type=jnp.float32) + b1
    out_ref[...] = x + jnp.maximum(z, 0.0)


# ---------------------------------------------------------------------------
# Wrapper-side packing helpers
# ---------------------------------------------------------------------------
def _make_tap_masks(N, H, W, dtype):
    """(9, N*H*W) {0,1} masks: tap t=(dy*3+dx) is valid at destination (h, w)
    iff the source pixel (h+dy-1, w+dx-1) lies inside the image."""
    h = jnp.arange(H, dtype=jnp.int32).reshape(1, H, 1)
    w = jnp.arange(W, dtype=jnp.int32).reshape(1, 1, W)
    rows = []
    for dy in range(3):
        for dx in range(3):
            ok = ((h + (dy - 1) >= 0) & (h + (dy - 1) <= H - 1) &
                  (w + (dx - 1) >= 0) & (w + (dx - 1) <= W - 1))
            rows.append(jnp.broadcast_to(ok, (N, H, W)).reshape(1, N * H * W))
    return jnp.concatenate(rows, axis=0).astype(dtype)


def _pack_params(params, num_convs, rdb, matmul_dtype):
    """Module-layout params -> packed, pre-cast, channels-first kernel arrays."""
    kmax = 9 * num_convs * rdb
    w3_rows, gb_cols = [], []
    idx = 0
    for i in range(num_convs):
        w, _b, gamma, beta = params[idx:idx + 4]  # conv bias unused (cancels in BN)
        idx += 4
        cin = (i + 1) * rdb
        # HWIO (3,3,cin,rdb) -> (rdb_out, 9*cin), row order (segment, dy, dx, ci)
        # to match the kernel's running tap-stack row order; zero-pad to kmax.
        wp = (w.reshape(3, 3, i + 1, rdb, rdb)
               .transpose(4, 2, 0, 1, 3)
               .reshape(rdb, 9 * cin))
        w3_rows.append(jnp.pad(wp, ((0, 0), (0, kmax - 9 * cin))))
        gb_cols.append(gamma.reshape(rdb, 1))
        gb_cols.append(beta.reshape(rdb, 1))
    w1, b1 = params[idx], params[idx + 1]
    w3p = jnp.stack(w3_rows, axis=0).astype(matmul_dtype)   # (num_convs, rdb, kmax)
    gb = jnp.concatenate(gb_cols, axis=1)                   # (rdb, 2*num_convs) f32
    w1t = jnp.transpose(w1, (1, 0)).astype(matmul_dtype)    # (Co, (num_convs+1)*rdb)
    b1t = b1.reshape(-1, 1)                                 # (Co, 1) f32
    return w3p, gb, w1t, b1t


def res_dense_block(x_nchw, params, num_convs, rdb_channels,
                    matmul_dtype=jnp.bfloat16):
    """x_nchw: (N, C0, H, W) with C0 == rdb_channels == out_channels. Returns NCHW.

    matmul_dtype=jnp.bfloat16 (default) runs the MXU at full rate on v6e/v7x;
    BN statistics, matmul accumulators and the residual stay f32.  Pass
    matmul_dtype=jnp.float32 for a bit-close match to the PyTorch reference.
    """
    N, C0, H, W = x_nchw.shape
    assert C0 == rdb_channels, "first dense conv expects rdb_channels inputs"
    w3p, gb, w1t, b1t = _pack_params(params, num_convs, rdb_channels, matmul_dtype)
    Co = w1t.shape[0]
    assert Co == C0, "residual add requires out_channels == rdb_channels"
    NHW = N * H * W

    # Single channels-first (C0, N*H*W) input: serves both the conv path and the
    # residual add (no duplicate x DMA, no NHWC copy).
    x_cf = jnp.transpose(x_nchw.astype(jnp.float32), (1, 0, 2, 3)).reshape(C0, NHW)
    masks = _make_tap_masks(N, H, W, matmul_dtype)

    vmem = pl.BlockSpec(memory_space=pltpu.MemorySpace.VMEM)
    out_cf = pl.pallas_call(
        functools.partial(rdb_kernel, num_convs, rdb_channels, W, matmul_dtype),
        out_shape=jax.ShapeDtypeStruct((Co, NHW), jnp.float32),
        in_specs=[vmem] * 6,
        out_specs=vmem,
        compiler_params=pltpu.CompilerParams(
            # 64 MiB fits every generation (v7x physical VMEM is 64 MiB);
            # raise toward ~100 MiB on v5e/v6e for larger resident shapes.
            vmem_limit_bytes=64 * 1024 * 1024),
    )(x_cf, masks, w3p, gb, w1t, b1t)

    # (Co, N*H*W) lane-dense slab -> NCHW
    return jnp.transpose(out_cf.reshape(Co, N, H, W), (1, 0, 2, 3))


# ---------------------------------------------------------------------------
# Deterministic parameter init (shapes follow ResDenseBlock.__init__)
# ---------------------------------------------------------------------------
def init_params(key, num_convs, rdb_channels, out_channels):
    params = []
    for i in range(num_convs):
        cin = (i + 1) * rdb_channels
        key, k1, k2, k3, k4 = jax.random.split(key, 5)
        w = 0.1 * jax.random.normal(k1, (3, 3, cin, rdb_channels), jnp.float32)
        b = 0.05 * jax.random.normal(k2, (1, rdb_channels), jnp.float32)
        gamma = 1.0 + 0.1 * jax.random.normal(k3, (1, rdb_channels), jnp.float32)
        beta = 0.05 * jax.random.normal(k4, (1, rdb_channels), jnp.float32)
        params += [w, b, gamma, beta]
    cin = (num_convs + 1) * rdb_channels
    key, k1, k2 = jax.random.split(key, 3)
    w1 = 0.1 * jax.random.normal(k1, (cin, out_channels), jnp.float32)
    b1 = 0.05 * jax.random.normal(k2, (1, out_channels), jnp.float32)
    params += [w1, b1]
    return params


# ---------------------------------------------------------------------------
# Pure-JAX reference (NCHW, mirrors the PyTorch forward, bias included)
# ---------------------------------------------------------------------------
def ref_forward(x_nchw, params, num_convs):
    x = x_nchw.astype(jnp.float32)
    y = x
    idx = 0
    for _ in range(num_convs):
        w, b, g, be = params[idx:idx + 4]
        idx += 4
        out = jax.lax.conv_general_dilated(
            x, w, (1, 1), "SAME",
            dimension_numbers=("NCHW", "HWIO", "NCHW"),
        ) + b.reshape(1, -1, 1, 1)
        mean = out.mean(axis=(0, 2, 3), keepdims=True)
        var = ((out - mean) ** 2).mean(axis=(0, 2, 3), keepdims=True)
        out = (out - mean) / jnp.sqrt(var + EPS) * g.reshape(1, -1, 1, 1) \
            + be.reshape(1, -1, 1, 1)
        out = jnp.maximum(out, 0.0)
        x = jnp.concatenate([x, out], axis=1)
    w1, b1 = params[idx], params[idx + 1]
    cin, cout = w1.shape
    z = jax.lax.conv_general_dilated(
        x, w1.reshape(1, 1, cin, cout), (1, 1), "VALID",
        dimension_numbers=("NCHW", "HWIO", "NCHW"),
    ) + b1.reshape(1, -1, 1, 1)
    return y + jnp.maximum(z, 0.0)


if __name__ == "__main__":
    num_convs = 3
    rdb_channels = 4
    out_channels = 4      # must equal rdb_channels for the residual add
    N, H, W = 2, 16, 16

    key = jax.random.PRNGKey(0)
    key, kx = jax.random.split(key)
    x = jax.random.normal(kx, (N, rdb_channels, H, W), jnp.float32)  # NCHW
    params = init_params(key, num_convs, rdb_channels, out_channels)

    ref = jax.block_until_ready(ref_forward(x, params, num_convs))

    # f32 MXU path: bit-close to the PyTorch-style reference.
    out_f32 = jax.block_until_ready(
        res_dense_block(x, params, num_convs, rdb_channels,
                        matmul_dtype=jnp.float32))
    assert out_f32.shape == (N, out_channels, H, W)
    assert jnp.allclose(out_f32, ref, atol=2e-3, rtol=2e-3), \
        f"f32 path: max abs diff {jnp.max(jnp.abs(out_f32 - ref))}"

    # Default bf16 MXU path (full-rate MXU on v6e/v7x).  BN statistics are
    # computed from bf16-matmul outputs, so the tolerance is intentionally loose.
    out_bf16 = jax.block_until_ready(
        res_dense_block(x, params, num_convs, rdb_channels))
    assert out_bf16.shape == (N, out_channels, H, W)
    assert jnp.allclose(out_bf16, ref, atol=1e-1, rtol=1e-1), \
        f"bf16 path: max abs diff {jnp.max(jnp.abs(out_bf16 - ref))}"

    print("KERNEL_OK")
</pallas_src>

<mosaic_0001>
module attributes {stable_mosaic.version = 11 : i64} {
  func.func @rdb_kernel(%arg0: memref<4x512xf32, #tpu.memory_space<vmem>>, %arg1: memref<9x512xf32, #tpu.memory_space<vmem>>, %arg2: memref<3x4x108xf32, #tpu.memory_space<vmem>>, %arg3: memref<4x6xf32, #tpu.memory_space<vmem>>, %arg4: memref<4x16xf32, #tpu.memory_space<vmem>>, %arg5: memref<4x1xf32, #tpu.memory_space<vmem>>, %arg6: memref<4x512xf32, #tpu.memory_space<vmem>>) attributes {dimension_semantics = [], scalar_prefetch = 0 : i64, scratch_operands = 0 : i64, tpu.core_type = #tpu.core_type<tc>} {
    %c0 = arith.constant 0 : index
    %c0_0 = arith.constant 0 : index
    %0 = vector.load %arg0[%c0, %c0_0] : memref<4x512xf32, #tpu.memory_space<vmem>>, vector<4x512xf32>
    %c0_1 = arith.constant 0 : index
    %c0_2 = arith.constant 0 : index
    %1 = vector.load %arg1[%c0_1, %c0_2] : memref<9x512xf32, #tpu.memory_space<vmem>>, vector<9x512xf32>
    %c0_3 = arith.constant 0 : index
    %c0_4 = arith.constant 0 : index
    %c0_5 = arith.constant 0 : index
    %2 = vector.load %arg2[%c0_3, %c0_4, %c0_5] : memref<3x4x108xf32, #tpu.memory_space<vmem>>, vector<3x4x108xf32>
    %c0_6 = arith.constant 0 : index
    %c0_7 = arith.constant 0 : index
    %3 = vector.load %arg3[%c0_6, %c0_7] : memref<4x6xf32, #tpu.memory_space<vmem>>, vector<4x6xf32>
    %c0_8 = arith.constant 0 : index
    %c0_9 = arith.constant 0 : index
    %4 = vector.load %arg4[%c0_8, %c0_9] : memref<4x16xf32, #tpu.memory_space<vmem>>, vector<4x16xf32>
    %c0_10 = arith.constant 0 : index
    %c0_11 = arith.constant 0 : index
    %5 = vector.load %arg5[%c0_10, %c0_11] : memref<4x1xf32, #tpu.memory_space<vmem>>, vector<4x1xf32>
    %c17_i32 = arith.constant 17 : i32
    %6 = tpu.dynamic_rotate %0 by %c17_i32 dim 1 : vector<4x512xf32>, i32 -> vector<4x512xf32>
    %7 = vector.extract_strided_slice %1 {offsets = [0, 0], sizes = [1, 512], strides = [1, 1]} : vector<9x512xf32> to vector<1x512xf32>
    %8 = vector.broadcast %7 : vector<1x512xf32> to vector<4x512xf32>
    %9 = arith.mulf %6, %8 : vector<4x512xf32>
    %c16_i32 = arith.constant 16 : i32
    %10 = tpu.dynamic_rotate %0 by %c16_i32 dim 1 : vector<4x512xf32>, i32 -> vector<4x512xf32>
    %11 = vector.extract_strided_slice %1 {offsets = [1, 0], sizes = [1, 512], strides = [1, 1]} : vector<9x512xf32> to vector<1x512xf32>
    %12 = vector.broadcast %11 : vector<1x512xf32> to vector<4x512xf32>
    %13 = arith.mulf %10, %12 : vector<4x512xf32>
    %c15_i32 = arith.constant 15 : i32
    %14 = tpu.dynamic_rotate %0 by %c15_i32 dim 1 : vector<4x512xf32>, i32 -> vector<4x512xf32>
    %15 = vector.extract_strided_slice %1 {offsets = [2, 0], sizes = [1, 512], strides = [1, 1]} : vector<9x512xf32> to vector<1x512xf32>
    %16 = vector.broadcast %15 : vector<1x512xf32> to vector<4x512xf32>
    %17 = arith.mulf %14, %16 : vector<4x512xf32>
    %c1_i32 = arith.constant 1 : i32
    %18 = tpu.dynamic_rotate %0 by %c1_i32 dim 1 : vector<4x512xf32>, i32 -> vector<4x512xf32>
    %19 = vector.extract_strided_slice %1 {offsets = [3, 0], sizes = [1, 512], strides = [1, 1]} : vector<9x512xf32> to vector<1x512xf32>
    %20 = vector.broadcast %19 : vector<1x512xf32> to vector<4x512xf32>
    %21 = arith.mulf %18, %20 : vector<4x512xf32>
    %22 = vector.extract_strided_slice %1 {offsets = [4, 0], sizes = [1, 512], strides = [1, 1]} : vector<9x512xf32> to vector<1x512xf32>
    %23 = vector.broadcast %22 : vector<1x512xf32> to vector<4x512xf32>
    %24 = arith.mulf %0, %23 : vector<4x512xf32>
    %c511_i32 = arith.constant 511 : i32
    %25 = tpu.dynamic_rotate %0 by %c511_i32 dim 1 : vector<4x512xf32>, i32 -> vector<4x512xf32>
    %26 = vector.extract_strided_slice %1 {offsets = [5, 0], sizes = [1, 512], strides = [1, 1]} : vector<9x512xf32> to vector<1x512xf32>
    %27 = vector.broadcast %26 : vector<1x512xf32> to vector<4x512xf32>
    %28 = arith.mulf %25, %27 : vector<4x512xf32>
    %c497_i32 = arith.constant 497 : i32
    %29 = tpu.dynamic_rotate %0 by %c497_i32 dim 1 : vector<4x512xf32>, i32 -> vector<4x512xf32>
    %30 = vector.extract_strided_slice %1 {offsets = [6, 0], sizes = [1, 512], strides = [1, 1]} : vector<9x512xf32> to vector<1x512xf32>
    %31 = vector.broadcast %30 : vector<1x512xf32> to vector<4x512xf32>
    %32 = arith.mulf %29, %31 : vector<4x512xf32>
    %c496_i32 = arith.constant 496 : i32
    %33 = tpu.dynamic_rotate %0 by %c496_i32 dim 1 : vector<4x512xf32>, i32 -> vector<4x512xf32>
    %34 = vector.extract_strided_slice %1 {offsets = [7, 0], sizes = [1, 512], strides = [1, 1]} : vector<9x512xf32> to vector<1x512xf32>
    %35 = vector.broadcast %34 : vector<1x512xf32> to vector<4x512xf32>
    %36 = arith.mulf %33, %35 : vector<4x512xf32>
    %c495_i32 = arith.constant 495 : i32
    %37 = tpu.dynamic_rotate %0 by %c495_i32 dim 1 : vector<4x512xf32>, i32 -> vector<4x512xf32>
    %38 = vector.extract_strided_slice %1 {offsets = [8, 0], sizes = [1, 512], strides = [1, 1]} : vector<9x512xf32> to vector<1x512xf32>
    %39 = vector.broadcast %38 : vector<1x512xf32> to vector<4x512xf32>
    %40 = arith.mulf %37, %39 : vector<4x512xf32>
    %41 = tpu.concatenate %9, %13, %17, %21, %24, %28, %32, %36, %40 in 0 : vector<4x512xf32>, vector<4x512xf32>, vector<4x512xf32>, vector<4x512xf32>, vector<4x512xf32>, vector<4x512xf32>, vector<4x512xf32>, vector<4x512xf32>, vector<4x512xf32> -> vector<36x512xf32>
    %42 = vector.extract_strided_slice %2 {offsets = [0, 0, 0], sizes = [1, 4, 36], strides = [1, 1, 1]} : vector<3x4x108xf32> to vector<1x4x36xf32>
    %43 = vector.shape_cast %42 : vector<1x4x36xf32> to vector<4x36xf32>
    %cst = arith.constant dense<0.000000e+00> : vector<4x512xf32>
    %44 = tpu.matmul %43, %41, %cst {dimension_numbers = #tpu.dot_dimension_numbers<[1], [0], [0], [1], [0, 0, 1, 1], [], []>} : vector<4x36xf32>, vector<36x512xf32>, vector<4x512xf32> -> vector<4x512xf32>
    %cst_12 = arith.constant dense<0.000000e+00> : vector<4xf32>
    %45 = vector.multi_reduction <add>, %44, %cst_12 [1] : vector<4x512xf32> to vector<4xf32>
    %46 = vector.shape_cast %45 : vector<4xf32> to vector<4x1xf32>
    %cst_13 = arith.constant 0.001953125 : f32
    %47 = vector.broadcast %cst_13 : f32 to vector<4x1xf32>
    %48 = arith.mulf %46, %47 : vector<4x1xf32>
    %49 = vector.broadcast %48 : vector<4x1xf32> to vector<4x512xf32>
    %50 = arith.subf %44, %49 : vector<4x512xf32>
    %51 = arith.mulf %50, %50 : vector<4x512xf32>
    %cst_14 = arith.constant dense<0.000000e+00> : vector<4xf32>
    %52 = vector.multi_reduction <add>, %51, %cst_14 [1] : vector<4x512xf32> to vector<4xf32>
    %53 = vector.shape_cast %52 : vector<4xf32> to vector<4x1xf32>
    %cst_15 = arith.constant 0.001953125 : f32
    %54 = vector.broadcast %cst_15 : f32 to vector<4x1xf32>
    %55 = arith.mulf %53, %54 : vector<4x1xf32>
    %56 = vector.extract_strided_slice %3 {offsets = [0, 0], sizes = [4, 1], strides = [1, 1]} : vector<4x6xf32> to vector<4x1xf32>
    %cst_16 = arith.constant 9.99999974E-6 : f32
    %57 = vector.broadcast %cst_16 : f32 to vector<4x1xf32>
    %58 = arith.addf %55, %57 : vector<4x1xf32>
    %59 = math.rsqrt %58 : vector<4x1xf32>
    %60 = arith.mulf %56, %59 : vector<4x1xf32>
    %61 = vector.broadcast %60 : vector<4x1xf32> to vector<4x512xf32>
    %62 = arith.mulf %50, %61 : vector<4x512xf32>
    %63 = vector.extract_strided_slice %3 {offsets = [0, 1], sizes = [4, 1], strides = [1, 1]} : vector<4x6xf32> to vector<4x1xf32>
    %64 = vector.broadcast %63 : vector<4x1xf32> to vector<4x512xf32>
    %65 = arith.addf %62, %64 : vector<4x512xf32>
    %cst_17 = arith.constant 0.000000e+00 : f32
    %66 = vector.broadcast %cst_17 : f32 to vector<4x512xf32>
    %67 = arith.maximumf %65, %66 : vector<4x512xf32>
    %68 = tpu.concatenate %0, %67 in 0 : vector<4x512xf32>, vector<4x512xf32> -> vector<8x512xf32>
    %c17_i32_18 = arith.constant 17 : i32
    %69 = tpu.dynamic_rotate %67 by %c17_i32_18 dim 1 : vector<4x512xf32>, i32 -> vector<4x512xf32>
    %70 = vector.extract_strided_slice %1 {offsets = [0, 0], sizes = [1, 512], strides = [1, 1]} : vector<9x512xf32> to vector<1x512xf32>
    %71 = vector.broadcast %70 : vector<1x512xf32> to vector<4x512xf32>
    %72 = arith.mulf %69, %71 : vector<4x512xf32>
    %c16_i32_19 = arith.constant 16 : i32
    %73 = tpu.dynamic_rotate %67 by %c16_i32_19 dim 1 : vector<4x512xf32>, i32 -> vector<4x512xf32>
    %74 = vector.extract_strided_slice %1 {offsets = [1, 0], sizes = [1, 512], strides = [1, 1]} : vector<9x512xf32> to vector<1x512xf32>
    %75 = vector.broadcast %74 : vector<1x512xf32> to vector<4x512xf32>
    %76 = arith.mulf %73, %75 : vector<4x512xf32>
    %c15_i32_20 = arith.constant 15 : i32
    %77 = tpu.dynamic_rotate %67 by %c15_i32_20 dim 1 : vector<4x512xf32>, i32 -> vector<4x512xf32>
    %78 = vector.extract_strided_slice %1 {offsets = [2, 0], sizes = [1, 512], strides = [1, 1]} : vector<9x512xf32> to vector<1x512xf32>
    %79 = vector.broadcast %78 : vector<1x512xf32> to vector<4x512xf32>
    %80 = arith.mulf %77, %79 : vector<4x512xf32>
    %c1_i32_21 = arith.constant 1 : i32
    %81 = tpu.dynamic_rotate %67 by %c1_i32_21 dim 1 : vector<4x512xf32>, i32 -> vector<4x512xf32>
    %82 = vector.extract_strided_slice %1 {offsets = [3, 0], sizes = [1, 512], strides = [1, 1]} : vector<9x512xf32> to vector<1x512xf32>
    %83 = vector.broadcast %82 : vector<1x512xf32> to vector<4x512xf32>
    %84 = arith.mulf %81, %83 : vector<4x512xf32>
    %85 = vector.extract_strided_slice %1 {offsets = [4, 0], sizes = [1, 512], strides = [1, 1]} : vector<9x512xf32> to vector<1x512xf32>
    %86 = vector.broadcast %85 : vector<1x512xf32> to vector<4x512xf32>
    %87 = arith.mulf %67, %86 : vector<4x512xf32>
    %c511_i32_22 = arith.constant 511 : i32
    %88 = tpu.dynamic_rotate %67 by %c511_i32_22 dim 1 : vector<4x512xf32>, i32 -> vector<4x512xf32>
    %89 = vector.extract_strided_slice %1 {offsets = [5, 0], sizes = [1, 512], strides = [1, 1]} : vector<9x512xf32> to vector<1x512xf32>
    %90 = vector.broadcast %89 : vector<1x512xf32> to vector<4x512xf32>
    %91 = arith.mulf %88, %90 : vector<4x512xf32>
    %c497_i32_23 = arith.constant 497 : i32
    %92 = tpu.dynamic_rotate %67 by %c497_i32_23 dim 1 : vector<4x512xf32>, i32 -> vector<4x512xf32>
    %93 = vector.extract_strided_slice %1 {offsets = [6, 0], sizes = [1, 512], strides = [1, 1]} : vector<9x512xf32> to vector<1x512xf32>
    %94 = vector.broadcast %93 : vector<1x512xf32> to vector<4x512xf32>
    %95 = arith.mulf %92, %94 : vector<4x512xf32>
    %c496_i32_24 = arith.constant 496 : i32
    %96 = tpu.dynamic_rotate %67 by %c496_i32_24 dim 1 : vector<4x512xf32>, i32 -> vector<4x512xf32>
    %97 = vector.extract_strided_slice %1 {offsets = [7, 0], sizes = [1, 512], strides = [1, 1]} : vector<9x512xf32> to vector<1x512xf32>
    %98 = vector.broadcast %97 : vector<1x512xf32> to vector<4x512xf32>
    %99 = arith.mulf %96, %98 : vector<4x512xf32>
    %c495_i32_25 = arith.constant 495 : i32
    %100 = tpu.dynamic_rotate %67 by %c495_i32_25 dim 1 : vector<4x512xf32>, i32 -> vector<4x512xf32>
    %101 = vector.extract_strided_slice %1 {offsets = [8, 0], sizes = [1, 512], strides = [1, 1]} : vector<9x512xf32> to vector<1x512xf32>
    %102 = vector.broadcast %101 : vector<1x512xf32> to vector<4x512xf32>
    %103 = arith.mulf %100, %102 : vector<4x512xf32>
    %104 = tpu.concatenate %72, %76, %80, %84, %87, %91, %95, %99, %103 in 0 : vector<4x512xf32>, vector<4x512xf32>, vector<4x512xf32>, vector<4x512xf32>, vector<4x512xf32>, vector<4x512xf32>, vector<4x512xf32>, vector<4x512xf32>, vector<4x512xf32> -> vector<36x512xf32>
    %105 = tpu.concatenate %41, %104 in 0 : vector<36x512xf32>, vector<36x512xf32> -> vector<72x512xf32>
    %106 = vector.extract_strided_slice %2 {offsets = [1, 0, 0], sizes = [1, 4, 72], strides = [1, 1, 1]} : vector<3x4x108xf32> to vector<1x4x72xf32>
    %107 = vector.shape_cast %106 : vector<1x4x72xf32> to vector<4x72xf32>
    %cst_26 = arith.constant dense<0.000000e+00> : vector<4x512xf32>
    %108 = tpu.matmul %107, %105, %cst_26 {dimension_numbers = #tpu.dot_dimension_numbers<[1], [0], [0], [1], [0, 0, 1, 1], [], []>} : vector<4x72xf32>, vector<72x512xf32>, vector<4x512xf32> -> vector<4x512xf32>
    %cst_27 = arith.constant dense<0.000000e+00> : vector<4xf32>
    %109 = vector.multi_reduction <add>, %108, %cst_27 [1] : vector<4x512xf32> to vector<4xf32>
    %110 = vector.shape_cast %109 : vector<4xf32> to vector<4x1xf32>
    %cst_28 = arith.constant 0.001953125 : f32
    %111 = vector.broadcast %cst_28 : f32 to vector<4x1xf32>
    %112 = arith.mulf %110, %111 : vector<4x1xf32>
    %113 = vector.broadcast %112 : vector<4x1xf32> to vector<4x512xf32>
    %114 = arith.subf %108, %113 : vector<4x512xf32>
    %115 = arith.mulf %114, %114 : vector<4x512xf32>
    %cst_29 = arith.constant dense<0.000000e+00> : vector<4xf32>
    %116 = vector.multi_reduction <add>, %115, %cst_29 [1] : vector<4x512xf32> to vector<4xf32>
    %117 = vector.shape_cast %116 : vector<4xf32> to vector<4x1xf32>
    %cst_30 = arith.constant 0.001953125 : f32
    %118 = vector.broadcast %cst_30 : f32 to vector<4x1xf32>
    %119 = arith.mulf %117, %118 : vector<4x1xf32>
    %120 = vector.extract_strided_slice %3 {offsets = [0, 2], sizes = [4, 1], strides = [1, 1]} : vector<4x6xf32> to vector<4x1xf32>
    %cst_31 = arith.constant 9.99999974E-6 : f32
    %121 = vector.broadcast %cst_31 : f32 to vector<4x1xf32>
    %122 = arith.addf %119, %121 : vector<4x1xf32>
    %123 = math.rsqrt %122 : vector<4x1xf32>
    %124 = arith.mulf %120, %123 : vector<4x1xf32>
    %125 = vector.broadcast %124 : vector<4x1xf32> to vector<4x512xf32>
    %126 = arith.mulf %114, %125 : vector<4x512xf32>
    %127 = vector.extract_strided_slice %3 {offsets = [0, 3], sizes = [4, 1], strides = [1, 1]} : vector<4x6xf32> to vector<4x1xf32>
    %128 = vector.broadcast %127 : vector<4x1xf32> to vector<4x512xf32>
    %129 = arith.addf %126, %128 : vector<4x512xf32>
    %cst_32 = arith.constant 0.000000e+00 : f32
    %130 = vector.broadcast %cst_32 : f32 to vector<4x512xf32>
    %131 = arith.maximumf %129, %130 : vector<4x512xf32>
    %132 = tpu.concatenate %68, %131 in 0 : vector<8x512xf32>, vector<4x512xf32> -> vector<12x512xf32>
    %c17_i32_33 = arith.constant 17 : i32
    %133 = tpu.dynamic_rotate %131 by %c17_i32_33 dim 1 : vector<4x512xf32>, i32 -> vector<4x512xf32>
    %134 = vector.extract_strided_slice %1 {offsets = [0, 0], sizes = [1, 512], strides = [1, 1]} : vector<9x512xf32> to vector<1x512xf32>
    %135 = vector.broadcast %134 : vector<1x512xf32> to vector<4x512xf32>
    %136 = arith.mulf %133, %135 : vector<4x512xf32>
    %c16_i32_34 = arith.constant 16 : i32
    %137 = tpu.dynamic_rotate %131 by %c16_i32_34 dim 1 : vector<4x512xf32>, i32 -> vector<4x512xf32>
    %138 = vector.extract_strided_slice %1 {offsets = [1, 0], sizes = [1, 512], strides = [1, 1]} : vector<9x512xf32> to vector<1x512xf32>
    %139 = vector.broadcast %138 : vector<1x512xf32> to vector<4x512xf32>
    %140 = arith.mulf %137, %139 : vector<4x512xf32>
    %c15_i32_35 = arith.constant 15 : i32
    %141 = tpu.dynamic_rotate %131 by %c15_i32_35 dim 1 : vector<4x512xf32>, i32 -> vector<4x512xf32>
    %142 = vector.extract_strided_slice %1 {offsets = [2, 0], sizes = [1, 512], strides = [1, 1]} : vector<9x512xf32> to vector<1x512xf32>
    %143 = vector.broadcast %142 : vector<1x512xf32> to vector<4x512xf32>
    %144 = arith.mulf %141, %143 : vector<4x512xf32>
    %c1_i32_36 = arith.constant 1 : i32
    %145 = tpu.dynamic_rotate %131 by %c1_i32_36 dim 1 : vector<4x512xf32>, i32 -> vector<4x512xf32>
    %146 = vector.extract_strided_slice %1 {offsets = [3, 0], sizes = [1, 512], strides = [1, 1]} : vector<9x512xf32> to vector<1x512xf32>
    %147 = vector.broadcast %146 : vector<1x512xf32> to vector<4x512xf32>
    %148 = arith.mulf %145, %147 : vector<4x512xf32>
    %149 = vector.extract_strided_slice %1 {offsets = [4, 0], sizes = [1, 512], strides = [1, 1]} : vector<9x512xf32> to vector<1x512xf32>
    %150 = vector.broadcast %149 : vector<1x512xf32> to vector<4x512xf32>
    %151 = arith.mulf %131, %150 : vector<4x512xf32>
    %c511_i32_37 = arith.constant 511 : i32
    %152 = tpu.dynamic_rotate %131 by %c511_i32_37 dim 1 : vector<4x512xf32>, i32 -> vector<4x512xf32>
    %153 = vector.extract_strided_slice %1 {offsets = [5, 0], sizes = [1, 512], strides = [1, 1]} : vector<9x512xf32> to vector<1x512xf32>
    %154 = vector.broadcast %153 : vector<1x512xf32> to vector<4x512xf32>
    %155 = arith.mulf %152, %154 : vector<4x512xf32>
    %c497_i32_38 = arith.constant 497 : i32
    %156 = tpu.dynamic_rotate %131 by %c497_i32_38 dim 1 : vector<4x512xf32>, i32 -> vector<4x512xf32>
    %157 = vector.extract_strided_slice %1 {offsets = [6, 0], sizes = [1, 512], strides = [1, 1]} : vector<9x512xf32> to vector<1x512xf32>
    %158 = vector.broadcast %157 : vector<1x512xf32> to vector<4x512xf32>
    %159 = arith.mulf %156, %158 : vector<4x512xf32>
    %c496_i32_39 = arith.constant 496 : i32
    %160 = tpu.dynamic_rotate %131 by %c496_i32_39 dim 1 : vector<4x512xf32>, i32 -> vector<4x512xf32>
    %161 = vector.extract_strided_slice %1 {offsets = [7, 0], sizes = [1, 512], strides = [1, 1]} : vector<9x512xf32> to vector<1x512xf32>
    %162 = vector.broadcast %161 : vector<1x512xf32> to vector<4x512xf32>
    %163 = arith.mulf %160, %162 : vector<4x512xf32>
    %c495_i32_40 = arith.constant 495 : i32
    %164 = tpu.dynamic_rotate %131 by %c495_i32_40 dim 1 : vector<4x512xf32>, i32 -> vector<4x512xf32>
    %165 = vector.extract_strided_slice %1 {offsets = [8, 0], sizes = [1, 512], strides = [1, 1]} : vector<9x512xf32> to vector<1x512xf32>
    %166 = vector.broadcast %165 : vector<1x512xf32> to vector<4x512xf32>
    %167 = arith.mulf %164, %166 : vector<4x512xf32>
    %168 = tpu.concatenate %136, %140, %144, %148, %151, %155, %159, %163, %167 in 0 : vector<4x512xf32>, vector<4x512xf32>, vector<4x512xf32>, vector<4x512xf32>, vector<4x512xf32>, vector<4x512xf32>, vector<4x512xf32>, vector<4x512xf32>, vector<4x512xf32> -> vector<36x512xf32>
    %169 = tpu.concatenate %105, %168 in 0 : vector<72x512xf32>, vector<36x512xf32> -> vector<108x512xf32>
    %170 = vector.extract_strided_slice %2 {offsets = [2, 0, 0], sizes = [1, 4, 108], strides = [1, 1, 1]} : vector<3x4x108xf32> to vector<1x4x108xf32>
    %171 = vector.shape_cast %170 : vector<1x4x108xf32> to vector<4x108xf32>
    %cst_41 = arith.constant dense<0.000000e+00> : vector<4x512xf32>
    %172 = tpu.matmul %171, %169, %cst_41 {dimension_numbers = #tpu.dot_dimension_numbers<[1], [0], [0], [1], [0, 0, 1, 1], [], []>} : vector<4x108xf32>, vector<108x512xf32>, vector<4x512xf32> -> vector<4x512xf32>
    %cst_42 = arith.constant dense<0.000000e+00> : vector<4xf32>
    %173 = vector.multi_reduction <add>, %172, %cst_42 [1] : vector<4x512xf32> to vector<4xf32>
    %174 = vector.shape_cast %173 : vector<4xf32> to vector<4x1xf32>
    %cst_43 = arith.constant 0.001953125 : f32
    %175 = vector.broadcast %cst_43 : f32 to vector<4x1xf32>
    %176 = arith.mulf %174, %175 : vector<4x1xf32>
    %177 = vector.broadcast %176 : vector<4x1xf32> to vector<4x512xf32>
    %178 = arith.subf %172, %177 : vector<4x512xf32>
    %179 = arith.mulf %178, %178 : vector<4x512xf32>
    %cst_44 = arith.constant dense<0.000000e+00> : vector<4xf32>
    %180 = vector.multi_reduction <add>, %179, %cst_44 [1] : vector<4x512xf32> to vector<4xf32>
    %181 = vector.shape_cast %180 : vector<4xf32> to vector<4x1xf32>
    %cst_45 = arith.constant 0.001953125 : f32
    %182 = vector.broadcast %cst_45 : f32 to vector<4x1xf32>
    %183 = arith.mulf %181, %182 : vector<4x1xf32>
    %184 = vector.extract_strided_slice %3 {offsets = [0, 4], sizes = [4, 1], strides = [1, 1]} : vector<4x6xf32> to vector<4x1xf32>
    %cst_46 = arith.constant 9.99999974E-6 : f32
    %185 = vector.broadcast %cst_46 : f32 to vector<4x1xf32>
    %186 = arith.addf %183, %185 : vector<4x1xf32>
    %187 = math.rsqrt %186 : vector<4x1xf32>
    %188 = arith.mulf %184, %187 : vector<4x1xf32>
    %189 = vector.broadcast %188 : vector<4x1xf32> to vector<4x512xf32>
    %190 = arith.mulf %178, %189 : vector<4x512xf32>
    %191 = vector.extract_strided_slice %3 {offsets = [0, 5], sizes = [4, 1], strides = [1, 1]} : vector<4x6xf32> to vector<4x1xf32>
    %192 = vector.broadcast %191 : vector<4x1xf32> to vector<4x512xf32>
    %193 = arith.addf %190, %192 : vector<4x512xf32>
    %cst_47 = arith.constant 0.000000e+00 : f32
    %194 = vector.broadcast %cst_47 : f32 to vector<4x512xf32>
    %195 = arith.maximumf %193, %194 : vector<4x512xf32>
    %196 = tpu.concatenate %132, %195 in 0 : vector<12x512xf32>, vector<4x512xf32> -> vector<16x512xf32>
    %cst_48 = arith.constant dense<0.000000e+00> : vector<4x512xf32>
    %197 = tpu.matmul %4, %196, %cst_48 {dimension_numbers = #tpu.dot_dimension_numbers<[1], [0], [0], [1], [0, 0, 1, 1], [], []>} : vector<4x16xf32>, vector<16x512xf32>, vector<4x512xf32> -> vector<4x512xf32>
    %198 = vector.broadcast %5 : vector<4x1xf32> to vector<4x512xf32>
    %199 = arith.addf %197, %198 : vector<4x512xf32>
    %cst_49 = arith.constant 0.000000e+00 : f32
    %200 = vector.broadcast %cst_49 : f32 to vector<4x512xf32>
    %201 = arith.maximumf %199, %200 : vector<4x512xf32>
    %202 = arith.addf %0, %201 : vector<4x512xf32>
    %c0_50 = arith.constant 0 : index
    %c0_51 = arith.constant 0 : index
    %203 = vector.load %arg6[%c0_50, %c0_51] : memref<4x512xf32, #tpu.memory_space<vmem>>, vector<4x512xf32>
    tpu.vector_store %arg6[%c0_50, %c0_51], %202 {strides = array<i32>} : memref<4x512xf32, #tpu.memory_space<vmem>>, vector<4x512xf32>,
    return
  }
}

</mosaic_0001>

<llo_original>
// kernel: tpu_custom_call.1
$region0: #{tpu_custom_call.1}
  #allocation0 [shape = 'u32[]', space=smem, size = 0x4, offset = 0x4, fixed_abs, tag = 'smem constant byte address 0x4 - core index']
  #allocation1 [shape = 'u32[144,128]{1,0:T(1,128)}', space=vmem, size = 0x12000, scoped, tag = 'internal scratch']
  %s0 = inlined_call_operand.hbm [shape: f32[4,512], index: 0, kind: input, shape index: {}]
  %s1 = inlined_call_operand.hbm [shape: f32[9,512], index: 1, kind: input, shape index: {}]
  %s2 = inlined_call_operand.hbm [shape: f32[3,4,108], index: 2, kind: input, shape index: {}]
  %s3 = inlined_call_operand.hbm [shape: f32[4,6], index: 3, kind: input, shape index: {}]
  %s4 = inlined_call_operand.hbm [shape: f32[4,16], index: 4, kind: input, shape index: {}]
  %s5 = inlined_call_operand.hbm [shape: f32[4,1], index: 5, kind: input, shape index: {}]
  %s6 = inlined_call_operand.hbm [shape: f32[4,512], index: 6, kind: output, shape index: {}]
  %s7 = sld [smem:[#allocation0]]
  $region58: #{tpu_custom_call.1} parent=0
    _
  %s9 = ssub.s32 1, %s7
  %s10 = scalar_select 0, %s9, %s7
  $region1: #{tpu_custom_call.1} parent=0
    #allocation2 [shape = 'u8[8192]{0}', space=vmem, size = 0x2000, scoped, tag = 'input window, operand 0, single buffered']
    #allocation3 [shape = 's32[1]{0}', space=sflag, size = 0x4, scoped, tag = 'scoped memory for tpu_custom_call.1']
    #allocation4 [shape = 's32[1]{0}', space=sflag, size = 0x4, scoped, tag = 'scoped memory for tpu_custom_call.1']
    #allocation5 [shape = 'u8[32768]{0}', space=vmem, size = 0x8000, scoped, tag = 'input window, operand 1, single buffered']
    #allocation6 [shape = 's32[1]{0}', space=sflag, size = 0x4, scoped, tag = 'scoped memory for tpu_custom_call.1']
    #allocation7 [shape = 'u8[6144]{0}', space=vmem, size = 0x1800, scoped, tag = 'input window, operand 2, single buffered']
    #allocation8 [shape = 'u8[2048]{0}', space=vmem, size = 0x800, scoped, tag = 'input window, operand 3, single buffered']
    #allocation9 [shape = 's32[1]{0}', space=sflag, size = 0x4, scoped, tag = 'scoped memory for tpu_custom_call.1']
    #allocation10 [shape = 'u8[2048]{0}', space=vmem, size = 0x800, scoped, tag = 'input window, operand 4, single buffered']
    #allocation11 [shape = 'u8[2048]{0}', space=vmem, size = 0x800, scoped, tag = 'input window, operand 5, single buffered']
    #allocation12 [shape = 's32[1]{0}', space=sflag, size = 0x4, scoped, tag = 'scoped memory for tpu_custom_call.1']
    #allocation13 [shape = 'u8[8192]{0}', space=vmem, size = 0x2000, scoped, tag = 'output window, operand 0, single buffered']
    %11 = vsyncpa [#allocation3], 0
    %12 = vsyncpa [#allocation6], 0
    %13 = vsyncpa [#allocation9], 0
    %14 = vsyncpa [#allocation12], 0
    %15 = vsyncpa [#allocation4], 0
    // Predicated region
    $region2: #{tpu_custom_call.1} parent=1 // pred_check
      _
    $region3: #{tpu_custom_call.1} parent=1 // pred_check_branch
      %17 = sbr.rel (0) target = $region5
    $region4: #{tpu_custom_call.1} parent=1 // pred_region
      %s19 = ssub.s32 256, 256
      %20 = vsyncadd [#allocation3], %s19
      %s22 = sshll.u32 [#allocation2], 4
      %s23 = int_to_ptr.vmem [resolvable:$true] %s22
      %25 = dma.hbm_to_vmem [thread:$0]  %s0, 256, %s23, [#allocation3]
    $region5: #{tpu_custom_call.1} parent=1 // pred_fallthru
      _
    // Predicated region
    $region6: #{tpu_custom_call.1} parent=1 // pred_check
      _
    $region7: #{tpu_custom_call.1} parent=1 // pred_check_branch
      %27 = sbr.rel (0) target = $region9
    $region8: #{tpu_custom_call.1} parent=1 // pred_region
      %s29 = ssub.s32 1024, 1024
      %30 = vsyncadd [#allocation6], %s29
      %s31 = sshll.u32 [#allocation5], 4
      %s32 = int_to_ptr.vmem [resolvable:$true] %s31
      %37 = dma.hbm_to_vmem [thread:$0]  %s1, 1024, %s32, [#allocation6], 512, 512, 32
    $region9: #{tpu_custom_call.1} parent=1 // pred_fallthru
      _
    // Predicated region
    $region10: #{tpu_custom_call.1} parent=1 // pred_check
      _
    $region11: #{tpu_custom_call.1} parent=1 // pred_check_branch
      %39 = sbr.rel (0) target = $region13
    $region12: #{tpu_custom_call.1} parent=1 // pred_region
      %s41 = ssub.s32 192, 192
      %42 = vsyncadd [#allocation6], %s41
      %s43 = sshll.u32 [#allocation7], 4
      %s44 = int_to_ptr.vmem [resolvable:$true] %s43
      %49 = dma.hbm_to_vmem [thread:$0]  %s2, 192, %s44, [#allocation6], 64, 64, 4
    $region13: #{tpu_custom_call.1} parent=1 // pred_fallthru
      _
    // Predicated region
    $region14: #{tpu_custom_call.1} parent=1 // pred_check
      _
    $region15: #{tpu_custom_call.1} parent=1 // pred_check_branch
      %51 = sbr.rel (0) target = $region17
    $region16: #{tpu_custom_call.1} parent=1 // pred_region
      %s53 = ssub.s32 64, 64
      %54 = vsyncadd [#allocation9], %s53
      %s56 = sshll.u32 [#allocation8], 4
      %s57 = int_to_ptr.vmem [resolvable:$true] %s56
      %59 = dma.hbm_to_vmem [thread:$0]  %s3, 64, %s57, [#allocation9]
    $region17: #{tpu_custom_call.1} parent=1 // pred_fallthru
      _
    // Predicated region
    $region18: #{tpu_custom_call.1} parent=1 // pred_check
      _
    $region19: #{tpu_custom_call.1} parent=1 // pred_check_branch
      %61 = sbr.rel (0) target = $region21
    $region20: #{tpu_custom_call.1} parent=1 // pred_region
      %s63 = ssub.s32 64, 64
      %64 = vsyncadd [#allocation9], %s63
      %s66 = sshll.u32 [#allocation10], 4
      %s67 = int_to_ptr.vmem [resolvable:$true] %s66
      %69 = dma.hbm_to_vmem [thread:$0]  %s4, 64, %s67, [#allocation9]
    $region21: #{tpu_custom_call.1} parent=1 // pred_fallthru
      _
    // Predicated region
    $region22: #{tpu_custom_call.1} parent=1 // pred_check
      _
    $region23: #{tpu_custom_call.1} parent=1 // pred_check_branch
      %71 = sbr.rel (0) target = $region25
    $region24: #{tpu_custom_call.1} parent=1 // pred_region
      %s73 = ssub.s32 64, 64
      %74 = vsyncadd [#allocation12], %s73
      %s76 = sshll.u32 [#allocation11], 4
      %s77 = int_to_ptr.vmem [resolvable:$true] %s76
      %79 = dma.hbm_to_vmem [thread:$0]  %s5, 64, %s77, [#allocation12]
    $region25: #{tpu_custom_call.1} parent=1 // pred_fallthru
      _
    // Predicated region
    $region26: #{tpu_custom_call.1} parent=1 // pred_check
      _
    $region27: #{tpu_custom_call.1} parent=1 // pred_check_branch
      %81 = sbr.rel (0) target = $region29
    $region28: #{tpu_custom_call.1} parent=1 // pred_region
      %82 = dma.done [#allocation3], 256
    $region29: #{tpu_custom_call.1} parent=1 // pred_fallthru
      _
    // Predicated region
    $region30: #{tpu_custom_call.1} parent=1 // pred_check
      _
    $region31: #{tpu_custom_call.1} parent=1 // pred_check_branch
      %84 = sbr.rel (0) target = $region33
    $region32: #{tpu_custom_call.1} parent=1 // pred_region
      %85 = dma.done [#allocation6], 1024
    $region33: #{tpu_custom_call.1} parent=1 // pred_fallthru
      _
    // Predicated region
    $region34: #{tpu_custom_call.1} parent=1 // pred_check
      _
    $region35: #{tpu_custom_call.1} parent=1 // pred_check_branch
      %87 = sbr.rel (0) target = $region37
    $region36: #{tpu_custom_call.1} parent=1 // pred_region
      %88 = dma.done [#allocation6], 192
    $region37: #{tpu_custom_call.1} parent=1 // pred_fallthru
      _
    // Predicated region
    $region38: #{tpu_custom_call.1} parent=1 // pred_check
      _
    $region39: #{tpu_custom_call.1} parent=1 // pred_check_branch
      %90 = sbr.rel (0) target = $region41
    $region40: #{tpu_custom_call.1} parent=1 // pred_region
      %91 = dma.done [#allocation9], 64
    $region41: #{tpu_custom_call.1} parent=1 // pred_fallthru
      _
    // Predicated region
    $region42: #{tpu_custom_call.1} parent=1 // pred_check
      _
    $region43: #{tpu_custom_call.1} parent=1 // pred_check_branch
      %93 = sbr.rel (0) target = $region45
    $region44: #{tpu_custom_call.1} parent=1 // pred_region
      %94 = dma.done [#allocation9], 64
    $region45: #{tpu_custom_call.1} parent=1 // pred_fallthru
      _
    // Predicated region
    $region46: #{tpu_custom_call.1} parent=1 // pred_check
      _
    $region47: #{tpu_custom_call.1} parent=1 // pred_check_branch
      %96 = sbr.rel (0) target = $region49
    $region48: #{tpu_custom_call.1} parent=1 // pred_region
      %97 = dma.done [#allocation12], 64
    $region49: #{tpu_custom_call.1} parent=1 // pred_fallthru
      _
    %v98 = vld [vmem:[#allocation2] sm:$0xff]
    %v99 = vld [vmem:[#allocation2 + $0x8] sm:$0xff]
    %v100 = vld [vmem:[#allocation5] sm:$0xff]
    %v101 = vld [vmem:[#allocation5 + $0x8] sm:$0xff]
    %v102 = vld [vmem:[#allocation5 + $0x10] sm:$0xff]
    %v103 = vld [vmem:[#allocation5 + $0x18] sm:$0xff]
    %v104 = vld [vmem:[#allocation5 + $0x20] sm:$0x1]
    %v105 = vld [vmem:[#allocation5 + $0x28] sm:$0x1]
    %v106 = vld [vmem:[#allocation5 + $0x30] sm:$0x1]
    %v107 = vld [vmem:[#allocation5 + $0x38] sm:$0x1]
    %v108 = vld [vmem:[#allocation7] sm:$0xf]
    %v109 = vld [vmem:[#allocation7 + $0x4] sm:$0xf]
    %v110 = vld [vmem:[#allocation7 + $0x8] sm:$0xf]
    %v111 = vld [vmem:[#allocation8] sm:$0xf]
    %v112 = vld [vmem:[#allocation10] sm:$0xf]
    %v113 = vld [vmem:[#allocation11] sm:$0xf]
    %v116 = vcombine.high %v98, %v98
    %v117 = vcombine.high %v99, %v99
    %120 = vrot.lane.b32.xlu0 %v98, 17
    %v121 = vpop.permute.xlu0 %120
    %122 = vrot.lane.b32.xlu0 %v116, 17
    %v123 = vpop.permute.xlu0 %122
    %124 = vrot.lane.b32.xlu0 %v99, 17
    %v125 = vpop.permute.xlu0 %124
    %126 = vrot.lane.b32.xlu0 %v117, 17
    %v127 = vpop.permute.xlu0 %126
    %v128 = vlaneseq
    %v129 = vand.u32 %v128, 127
    %vm130 = vcmp.lt.s32.totalorder %v129, 17
    %v131 = vsel %vm130, %v125, %v127
    %v132 = vsel %vm130, %v123, %v125
    %v133 = vsel %vm130, %v121, %v123
    %v134 = vsel %vm130, %v127, %v121
    %v135 = vlaneseq
    %v136 = vshrl.u32 %v135, 7
    %v137 = vsub.s32 0, %v136
    %v138 = vrot.slane %v100, %v137
    %v139 = vlaneseq
    %v140 = vshrl.u32 %v139, 7
    %v141 = vsub.s32 0, %v140
    %v142 = vrot.slane %v101, %v141
    %v143 = vlaneseq
    %v144 = vshrl.u32 %v143, 7
    %v145 = vsub.s32 0, %v144
    %v146 = vrot.slane %v102, %v145
    %v147 = vlaneseq
    %v148 = vshrl.u32 %v147, 7
    %v149 = vsub.s32 0, %v148
    %v150 = vrot.slane %v103, %v149
    %v151 = vmul.f32 %v134, %v138
    %v152 = vmul.f32 %v133, %v142
    %v153 = vmul.f32 %v132, %v146
    %v154 = vmul.f32 %v131, %v150
    %155 = vrot.lane.b32.xlu0 %v98, 16
    %v156 = vpop.permute.xlu0 %155
    %157 = vrot.lane.b32.xlu0 %v116, 16
    %v158 = vpop.permute.xlu0 %157
    %159 = vrot.lane.b32.xlu0 %v99, 16
    %v160 = vpop.permute.xlu0 %159
    %161 = vrot.lane.b32.xlu0 %v117, 16
    %v162 = vpop.permute.xlu0 %161
    %vm163 = vcmp.lt.s32.totalorder %v129, 16
    %v164 = vsel %vm163, %v160, %v162
    %v165 = vsel %vm163, %v158, %v160
    %v166 = vsel %vm163, %v156, %v158
    %v167 = vsel %vm163, %v162, %v156
    %v168 = vlaneseq
    %v169 = vshrl.u32 %v168, 7
    %v170 = vsub.s32 1, %v169
    %v171 = vrot.slane %v100, %v170
    %v172 = vlaneseq
    %v173 = vshrl.u32 %v172, 7
    %v174 = vsub.s32 1, %v173
    %v175 = vrot.slane %v101, %v174
    %v176 = vlaneseq
    %v177 = vshrl.u32 %v176, 7
    %v178 = vsub.s32 1, %v177
    %v179 = vrot.slane %v102, %v178
    %v180 = vlaneseq
    %v181 = vshrl.u32 %v180, 7
    %v182 = vsub.s32 1, %v181
    %v183 = vrot.slane %v103, %v182
    %v184 = vmul.f32 %v167, %v171
    %v185 = vmul.f32 %v166, %v175
    %v186 = vmul.f32 %v165, %v179
    %v187 = vmul.f32 %v164, %v183
    %188 = vrot.lane.b32.xlu0 %v98, 15
    %v189 = vpop.permute.xlu0 %188
    %190 = vrot.lane.b32.xlu0 %v116, 15
    %v191 = vpop.permute.xlu0 %190
    %192 = vrot.lane.b32.xlu0 %v99, 15
    %v193 = vpop.permute.xlu0 %192
    %194 = vrot.lane.b32.xlu0 %v117, 15
    %v195 = vpop.permute.xlu0 %194
    %vm196 = vcmp.lt.s32.totalorder %v129, 15
    %v197 = vsel %vm196, %v193, %v195
    %v198 = vsel %vm196, %v191, %v193
    %v199 = vsel %vm196, %v189, %v191
    %v200 = vsel %vm196, %v195, %v189
    %v201 = vlaneseq
    %v202 = vshrl.u32 %v201, 7
    %v203 = vsub.s32 2, %v202
    %v204 = vrot.slane %v100, %v203
    %v205 = vlaneseq
    %v206 = vshrl.u32 %v205, 7
    %v207 = vsub.s32 2, %v206
    %v208 = vrot.slane %v101, %v207
    %v209 = vlaneseq
    %v210 = vshrl.u32 %v209, 7
    %v211 = vsub.s32 2, %v210
    %v212 = vrot.slane %v102, %v211
    %v213 = vlaneseq
    %v214 = vshrl.u32 %v213, 7
    %v215 = vsub.s32 2, %v214
    %v216 = vrot.slane %v103, %v215
    %v217 = vmul.f32 %v200, %v204
    %v218 = vmul.f32 %v199, %v208
    %v219 = vmul.f32 %v198, %v212
    %v220 = vmul.f32 %v197, %v216
    %221 = vrot.lane.b32.xlu0 %v98, 1
    %v222 = vpop.permute.xlu0 %221
    %223 = vrot.lane.b32.xlu0 %v116, 1
    %v224 = vpop.permute.xlu0 %223
    %225 = vrot.lane.b32.xlu0 %v99, 1
    %v226 = vpop.permute.xlu0 %225
    %227 = vrot.lane.b32.xlu0 %v117, 1
    %v228 = vpop.permute.xlu0 %227
    %vm229 = vcmp.lt.s32.totalorder %v129, 1
    %v230 = vsel %vm229, %v226, %v228
    %v231 = vsel %vm229, %v224, %v226
    %v232 = vsel %vm229, %v222, %v224
    %v233 = vsel %vm229, %v228, %v222
    %v234 = vlaneseq
    %v235 = vshrl.u32 %v234, 7
    %v236 = vsub.s32 3, %v235
    %v237 = vrot.slane %v100, %v236
    %v238 = vlaneseq
    %v239 = vshrl.u32 %v238, 7
    %v240 = vsub.s32 3, %v239
    %v241 = vrot.slane %v101, %v240
    %v242 = vlaneseq
    %v243 = vshrl.u32 %v242, 7
    %v244 = vsub.s32 3, %v243
    %v245 = vrot.slane %v102, %v244
    %v246 = vlaneseq
    %v247 = vshrl.u32 %v246, 7
    %v248 = vsub.s32 3, %v247
    %v249 = vrot.slane %v103, %v248
    %v250 = vmul.f32 %v233, %v237
    %v251 = vmul.f32 %v232, %v241
    %v252 = vmul.f32 %v231, %v245
    %v253 = vmul.f32 %v230, %v249
    %v254 = vlaneseq
    %v255 = vshrl.u32 %v254, 7
    %v256 = vsub.s32 4, %v255
    %v257 = vrot.slane %v100, %v256
    %v258 = vlaneseq
    %v259 = vshrl.u32 %v258, 7
    %v260 = vsub.s32 4, %v259
    %v261 = vrot.slane %v101, %v260
    %v262 = vlaneseq
    %v263 = vshrl.u32 %v262, 7
    %v264 = vsub.s32 4, %v263
    %v265 = vrot.slane %v102, %v264
    %v266 = vlaneseq
    %v267 = vshrl.u32 %v266, 7
    %v268 = vsub.s32 4, %v267
    %v269 = vrot.slane %v103, %v268
    %v274 = vcombine.low %v257, %v261
    %v275 = vcombine.low %v265, %v269
    %v278 = vmul.f32 %v98, %v274
    %v279 = vmul.f32 %v99, %v275
    %280 = vrot.lane.b32.xlu0 %v98, 127
    %v281 = vpop.permute.xlu0 %280
    %282 = vrot.lane.b32.xlu0 %v116, 127
    %v283 = vpop.permute.xlu0 %282
    %284 = vrot.lane.b32.xlu0 %v99, 127
    %v285 = vpop.permute.xlu0 %284
    %286 = vrot.lane.b32.xlu0 %v117, 127
    %v287 = vpop.permute.xlu0 %286
    %vm288 = vcmp.lt.s32.totalorder %v129, 127
    %v289 = vsel %vm288, %v285, %v287
    %v290 = vsel %vm288, %v283, %v285
    %v291 = vsel %vm288, %v281, %v283
    %v292 = vsel %vm288, %v287, %v281
    %v293 = vlaneseq
    %v294 = vshrl.u32 %v293, 7
    %v295 = vsub.s32 5, %v294
    %v296 = vrot.slane %v100, %v295
    %v297 = vlaneseq
    %v298 = vshrl.u32 %v297, 7
    %v299 = vsub.s32 5, %v298
    %v300 = vrot.slane %v101, %v299
    %v301 = vlaneseq
    %v302 = vshrl.u32 %v301, 7
    %v303 = vsub.s32 5, %v302
    %v304 = vrot.slane %v102, %v303
    %v305 = vlaneseq
    %v306 = vshrl.u32 %v305, 7
    %v307 = vsub.s32 5, %v306
    %v308 = vrot.slane %v103, %v307
    %v309 = vmul.f32 %v291, %v296
    %v310 = vmul.f32 %v290, %v300
    %v311 = vmul.f32 %v289, %v304
    %v312 = vmul.f32 %v292, %v308
    %313 = vrot.lane.b32.xlu0 %v98, 113
    %v314 = vpop.permute.xlu0 %313
    %315 = vrot.lane.b32.xlu0 %v116, 113
    %v316 = vpop.permute.xlu0 %315
    %317 = vrot.lane.b32.xlu0 %v99, 113
    %v318 = vpop.permute.xlu0 %317
    %319 = vrot.lane.b32.xlu0 %v117, 113
    %v320 = vpop.permute.xlu0 %319
    %vm321 = vcmp.lt.s32.totalorder %v129, 113
    %v322 = vsel %vm321, %v318, %v320
    %v323 = vsel %vm321, %v316, %v318
    %v324 = vsel %vm321, %v314, %v316
    %v325 = vsel %vm321, %v320, %v314
    %v326 = vlaneseq
    %v327 = vshrl.u32 %v326, 7
    %v328 = vsub.s32 6, %v327
    %v329 = vrot.slane %v100, %v328
    %v330 = vlaneseq
    %v331 = vshrl.u32 %v330, 7
    %v332 = vsub.s32 6, %v331
    %v333 = vrot.slane %v101, %v332
    %v334 = vlaneseq
    %v335 = vshrl.u32 %v334, 7
    %v336 = vsub.s32 6, %v335
    %v337 = vrot.slane %v102, %v336
    %v338 = vlaneseq
    %v339 = vshrl.u32 %v338, 7
    %v340 = vsub.s32 6, %v339
    %v341 = vrot.slane %v103, %v340
    %v342 = vmul.f32 %v324, %v329
    %v343 = vmul.f32 %v323, %v333
    %v344 = vmul.f32 %v322, %v337
    %v345 = vmul.f32 %v325, %v341
    %346 = vrot.lane.b32.xlu0 %v98, 112
    %v347 = vpop.permute.xlu0 %346
    %348 = vrot.lane.b32.xlu0 %v116, 112
    %v349 = vpop.permute.xlu0 %348
    %350 = vrot.lane.b32.xlu0 %v99, 112
    %v351 = vpop.permute.xlu0 %350
    %352 = vrot.lane.b32.xlu0 %v117, 112
    %v353 = vpop.permute.xlu0 %352
    %vm354 = vcmp.lt.s32.totalorder %v129, 112
    %v355 = vsel %vm354, %v351, %v353
    %v356 = vsel %vm354, %v349, %v351
    %v357 = vsel %vm354, %v347, %v349
    %v358 = vsel %vm354, %v353, %v347
    %v359 = vlaneseq
    %v360 = vshrl.u32 %v359, 7
    %v361 = vsub.s32 7, %v360
    %v362 = vrot.slane %v100, %v361
    %v363 = vlaneseq
    %v364 = vshrl.u32 %v363, 7
    %v365 = vsub.s32 7, %v364
    %v366 = vrot.slane %v101, %v365
    %v367 = vlaneseq
    %v368 = vshrl.u32 %v367, 7
    %v369 = vsub.s32 7, %v368
    %v370 = vrot.slane %v102, %v369
    %v371 = vlaneseq
    %v372 = vshrl.u32 %v371, 7
    %v373 = vsub.s32 7, %v372
    %v374 = vrot.slane %v103, %v373
    %v375 = vmul.f32 %v357, %v362
    %v376 = vmul.f32 %v356, %v366
    %v377 = vmul.f32 %v355, %v370
    %v378 = vmul.f32 %v358, %v374
    %379 = vrot.lane.b32.xlu0 %v98, 111
    %v380 = vpop.permute.xlu0 %379
    %381 = vrot.lane.b32.xlu0 %v116, 111
    %v382 = vpop.permute.xlu0 %381
    %383 = vrot.lane.b32.xlu0 %v99, 111
    %v384 = vpop.permute.xlu0 %383
    %385 = vrot.lane.b32.xlu0 %v117, 111
    %v386 = vpop.permute.xlu0 %385
    %vm387 = vcmp.lt.s32.totalorder %v129, 111
    %v388 = vsel %vm387, %v384, %v386
    %v389 = vsel %vm387, %v382, %v384
    %v390 = vsel %vm387, %v380, %v382
    %v391 = vsel %vm387, %v386, %v380
    %v392 = vlaneseq
    %v393 = vshrl.u32 %v392, 7
    %v394 = vsub.s32 0, %v393
    %v395 = vrot.slane %v104, %v394
    %v396 = vlaneseq
    %v397 = vshrl.u32 %v396, 7
    %v398 = vsub.s32 0, %v397
    %v399 = vrot.slane %v105, %v398
    %v400 = vlaneseq
    %v401 = vshrl.u32 %v400, 7
    %v402 = vsub.s32 0, %v401
    %v403 = vrot.slane %v106, %v402
    %v404 = vlaneseq
    %v405 = vshrl.u32 %v404, 7
    %v406 = vsub.s32 0, %v405
    %v407 = vrot.slane %v107, %v406
    %v408 = vmul.f32 %v390, %v395
    %v409 = vmul.f32 %v389, %v399
    %v410 = vmul.f32 %v388, %v403
    %v411 = vmul.f32 %v391, %v407
    %v416 = vrot.slane %v184, 4
    %v417 = vrot.slane %v185, 4
    %v418 = vrot.slane %v186, 4
    %v419 = vrot.slane %v187, 4
    %v428 = vrot.slane %v250, 4
    %v429 = vrot.slane %v251, 4
    %v430 = vrot.slane %v252, 4
    %v431 = vrot.slane %v253, 4
    %v438 = vcombine.high %v278, %v278
    %v439 = vcombine.high %v279, %v279
    %v446 = vrot.slane %v309, 4
    %v447 = vrot.slane %v310, 4
    %v448 = vrot.slane %v311, 4
    %v449 = vrot.slane %v312, 4
    %v458 = vrot.slane %v375, 4
    %v459 = vrot.slane %v376, 4
    %v460 = vrot.slane %v377, 4
    %v461 = vrot.slane %v378, 4
    %vm466 = vcmask 1043456
    %v467 = vsel %vm466, %v151, %v416
    %v468 = vsel %vm466, %v152, %v417
    %v469 = vsel %vm466, %v153, %v418
    %v470 = vsel %vm466, %v154, %v419
    %v471 = vsel %vm466, %v217, %v428
    %v472 = vsel %vm466, %v218, %v429
    %v473 = vsel %vm466, %v219, %v430
    %v474 = vsel %vm466, %v220, %v431
    %v475 = vsel %vm466, %v278, %v446
    %v476 = vsel %vm466, %v438, %v447
    %v477 = vsel %vm466, %v279, %v448
    %v478 = vsel %vm466, %v439, %v449
    %v479 = vsel %vm466, %v342, %v458
    %v480 = vsel %vm466, %v343, %v459
    %v481 = vsel %vm466, %v344, %v460
    %v482 = vsel %vm466, %v345, %v461
    %vm483 = vcmask 293888
    %v485 = vsel %vm483, %v108, 0
    %v488 = vsel %vm466, %v408, 0
    %v491 = vsel %vm466, %v409, 0
    %v494 = vsel %vm466, %v410, 0
    %v497 = vsel %vm466, %v411, 0
    %499 = vmatprep.subr.mxu0 %v468
    %500 = vmatpush1.msra.mxu0 %v467
    %501 = vmatprep.subr.mxu0 %v472
    %502 = vmatpush1.msra.mxu0 %v471
    %503 = vmatprep.subr.mxu0 %v476
    %504 = vmatpush1.msra.mxu0 %v475
    %505 = vmatprep.subr.mxu0 %v480
    %506 = vmatpush1.msra.mxu0 %v479
    %507 = vmatprep.subr.mxu0 %v491
    %508 = vmatpush1.msra.mxu0 %v488
    %509 = vmatprep.subr.mxu0 0.0
    %510 = vmatpush1.msra.mxu0 0.0
    %511 = vmatprep.subr.mxu0 0.0
    %512 = vmatpush1.msra.mxu0 0.0
    %513 = vmatprep.subr.mxu0 0.0
    %514 = vmatpush1.msra.mxu0 0.0
    %515 = vmatprep.subr.mxu0 0.0
    %516 = vmatpush1.msra.mxu0 0.0
    %517 = vmatprep.subr.mxu0 0.0
    %518 = vmatpush1.msra.mxu0 0.0
    %519 = vmatprep.subr.mxu0 0.0
    %520 = vmatpush1.msra.mxu0 0.0
    %521 = vmatprep.subr.mxu0 0.0
    %522 = vmatpush1.msra.mxu0 0.0
    %523 = vmatprep.subr.mxu0 0.0
    %524 = vmatpush1.msra.mxu0 0.0
    %525 = vmatprep.subr.mxu0 0.0
    %526 = vmatpush1.msra.mxu0 0.0
    %527 = vmatprep.subr.mxu0 0.0
    %528 = vmatpush1.msra.mxu0 0.0
    %529 = vmatprep.subr.mxu0 0.0
    %530 = vmatpush1.msra.mxu0 0.0
    %531 = vmatprep.subr.mxu0 0.0
    %532 = vmatpush1.msra.mxu0 0.0
    %533 = vmatprep.subr.mxu0 0.0
    %534 = vmatpush1.msra.mxu0 0.0
    %535 = vmatprep.subr.mxu0 0.0
    %536 = vmatpush1.msra.mxu0 0.0
    %537 = vmatprep.subr.mxu0 0.0
    %538 = vmatpush1.msra.mxu0 0.0
    %539 = vmatprep.subr.mxu0 0.0
    %540 = vmatpush1.msra.mxu0 0.0
    %541 = vmatprep.subr.mxu0 0.0
    %542 = vmatpush1.msra.mxu0 0.0
    %543 = vmatprep.subr.mxu0 0.0
    %544 = vmatpush1.msra.mxu0 0.0
    %545 = vmatprep.subr.mxu0 0.0
    %546 = vmatpush1.msra.mxu0 0.0
    %547 = vmatprep.subr.mxu0 0.0
    %548 = vmatpush1.msra.mxu0 0.0
    %549 = vmatprep.subr.mxu0 0.0
    %550 = vmatpush1.msra.mxu0 0.0
    %551 = vmatprep.subr.mxu0 0.0
    %552 = vmatpush1.msra.mxu0 0.0
    %553 = vmatprep.subr.mxu0 0.0
    %554 = vmatpush1.msra.mxu0 0.0
    %555 = vmatprep.subr.mxu0 0.0
    %556 = vmatpush1.msra.mxu0 0.0
    %557 = vmatprep.subr.mxu0 0.0
    %558 = vmatpush1.msra.mxu0 0.0
    %559 = vmatprep.subr.mxu0 0.0
    %560 = vmatpush1.msra.mxu0 0.0
    %561 = vmatprep.subr.mxu0 0.0
    %562 = vmatpush1.msra.mxu0 0.0
    %563 = vmatprep.mubr.f32.mxu0 0.0
    %564 = vmatmul.mubr.f32.gmra.mrb[0].mxu0 %v485
    %v565 = vpop.f32.mrb[0].mxu0
    %v566 = vadd.f32 0.0, %v565
    %v567 = vpop.f32.mrb[0].mxu0
    %v568 = vadd.f32 0.0, %v567
    %569 = vdwg.mxu0
    %570 = vmatprep.subr.mxu0 %v470
    %571 = vmatpush1.msra.mxu0 %v469
    %572 = vmatprep.subr.mxu0 %v474
    %573 = vmatpush1.msra.mxu0 %v473
    %574 = vmatprep.subr.mxu0 %v478
    %575 = vmatpush1.msra.mxu0 %v477
    %576 = vmatprep.subr.mxu0 %v482
    %577 = vmatpush1.msra.mxu0 %v481
    %578 = vmatprep.subr.mxu0 %v497
    %579 = vmatpush1.msra.mxu0 %v494
    %580 = vmatprep.subr.mxu0 0.0
    %581 = vmatpush1.msra.mxu0 0.0
    %582 = vmatprep.subr.mxu0 0.0
    %583 = vmatpush1.msra.mxu0 0.0
    %584 = vmatprep.subr.mxu0 0.0
    %585 = vmatpush1.msra.mxu0 0.0
    %586 = vmatprep.subr.mxu0 0.0
    %587 = vmatpush1.msra.mxu0 0.0
    %588 = vmatprep.subr.mxu0 0.0
    %589 = vmatpush1.msra.mxu0 0.0
    %590 = vmatprep.subr.mxu0 0.0
    %591 = vmatpush1.msra.mxu0 0.0
    %592 = vmatprep.subr.mxu0 0.0
    %593 = vmatpush1.msra.mxu0 0.0
    %594 = vmatprep.subr.mxu0 0.0
    %595 = vmatpush1.msra.mxu0 0.0
    %596 = vmatprep.subr.mxu0 0.0
    %597 = vmatpush1.msra.mxu0 0.0
    %598 = vmatprep.subr.mxu0 0.0
    %599 = vmatpush1.msra.mxu0 0.0
    %600 = vmatprep.subr.mxu0 0.0
    %601 = vmatpush1.msra.mxu0 0.0
    %602 = vmatprep.subr.mxu0 0.0
    %603 = vmatpush1.msra.mxu0 0.0
    %604 = vmatprep.subr.mxu0 0.0
    %605 = vmatpush1.msra.mxu0 0.0
    %606 = vmatprep.subr.mxu0 0.0
    %607 = vmatpush1.msra.mxu0 0.0
    %608 = vmatprep.subr.mxu0 0.0
    %609 = vmatpush1.msra.mxu0 0.0
    %610 = vmatprep.subr.mxu0 0.0
    %611 = vmatpush1.msra.mxu0 0.0
    %612 = vmatprep.subr.mxu0 0.0
    %613 = vmatpush1.msra.mxu0 0.0
    %614 = vmatprep.subr.mxu0 0.0
    %615 = vmatpush1.msra.mxu0 0.0
    %616 = vmatprep.subr.mxu0 0.0
    %617 = vmatpush1.msra.mxu0 0.0
    %618 = vmatprep.subr.mxu0 0.0
    %619 = vmatpush1.msra.mxu0 0.0
    %620 = vmatprep.subr.mxu0 0.0
    %621 = vmatpush1.msra.mxu0 0.0
    %622 = vmatprep.subr.mxu0 0.0
    %623 = vmatpush1.msra.mxu0 0.0
    %624 = vmatprep.subr.mxu0 0.0
    %625 = vmatpush1.msra.mxu0 0.0
    %626 = vmatprep.subr.mxu0 0.0
    %627 = vmatpush1.msra.mxu0 0.0
    %628 = vmatprep.subr.mxu0 0.0
    %629 = vmatpush1.msra.mxu0 0.0
    %630 = vmatprep.subr.mxu0 0.0
    %631 = vmatpush1.msra.mxu0 0.0
    %632 = vmatprep.subr.mxu0 0.0
    %633 = vmatpush1.msra.mxu0 0.0
    %634 = vmatprep.mubr.f32.mxu0 0.0
    %635 = vmatmul.mubr.f32.gmra.mrb[0].mxu0 %v485
    %v636 = vpop.f32.mrb[0].mxu0
    %v637 = vadd.f32 0.0, %v636
    %v638 = vpop.f32.mrb[0].mxu0
    %v639 = vadd.f32 0.0, %v638
    %640 = vdwg.mxu0
    %v641 = vsel %vm466, %v566, 0.0
    %v642 = vsel %vm466, %v568, 0.0
    %v643 = vadd.f32 %v641, %v642
    %v644 = vsel %vm466, %v637, 0.0
    %v645 = vadd.f32 %v643, %v644
    %v646 = vsel %vm466, %v639, 0.0
    %v647 = vadd.f32 %v645, %v646
    %648 = vadd.xlane.f32.xlu0 %v647
    %v649 = vpop.xlane.xlu0 %648
    %v650 = vmul.f32 %v649, 0.001953125
    %v651 = vsub.f32 %v566, %v650
    %v652 = vsub.f32 %v568, %v650
    %v653 = vsub.f32 %v637, %v650
    %v654 = vsub.f32 %v639, %v650
    %v655 = vmul.f32 %v651, %v651
    %v656 = vmul.f32 %v652, %v652
    %v657 = vmul.f32 %v653, %v653
    %v658 = vmul.f32 %v654, %v654
    %v659 = vsel %vm466, %v655, 0.0
    %v660 = vsel %vm466, %v656, 0.0
    %v661 = vadd.f32 %v659, %v660
    %v662 = vsel %vm466, %v657, 0.0
    %v663 = vadd.f32 %v661, %v662
    %v664 = vsel %vm466, %v658, 0.0
    %v665 = vadd.f32 %v663, %v664
    %666 = vadd.xlane.f32.xlu0 %v665
    %v667 = vpop.xlane.xlu0 %666
    %v668 = vmul.f32 %v667, 0.001953125
    %v669 = vadd.f32 %v668, 1e-05
    %v670 = vrsqrt.pop %v669
    %v671 = vmul.f32 %v111, %v670
    %673 = vset.pattern.permute.xlu0 0
    %674 = vperm.xlu0 %673, %v671
    %v675 = vpop.permute.xlu0 %674
    %v677 = vmul.f32 %v651, %v675
    %v678 = vmul.f32 %v652, %v675
    %v679 = vmul.f32 %v653, %v675
    %v680 = vmul.f32 %v654, %v675
    %682 = vset.pattern.permute.xlu0 1
    %683 = vperm.xlu0 %682, %v111
    %v684 = vpop.permute.xlu0 %683
    %v686 = vadd.f32 %v677, %v684
    %v687 = vadd.f32 %v678, %v684
    %v688 = vadd.f32 %v679, %v684
    %v689 = vadd.f32 %v680, %v684
    %v690 = vmax.f32 %v686, 0.0
    %v691 = vmax.f32 %v687, 0.0
    %v692 = vmax.f32 %v688, 0.0
    %v693 = vmax.f32 %v689, 0.0
    %v698 = vrot.slane %v690, 4
    %v699 = vrot.slane %v691, 4
    %v700 = vrot.slane %v692, 4
    %v701 = vrot.slane %v693, 4
    %v706 = vsel %vm466, %v98, %v698
    %v707 = vsel %vm466, %v116, %v699
    %v708 = vsel %vm466, %v99, %v700
    %v709 = vsel %vm466, %v117, %v701
    %710 = vrot.lane.b32.xlu0 %v690, 17
    %v711 = vpop.permute.xlu0 %710
    %712 = vrot.lane.b32.xlu0 %v691, 17
    %v713 = vpop.permute.xlu0 %712
    %714 = vrot.lane.b32.xlu0 %v692, 17
    %v715 = vpop.permute.xlu0 %714
    %716 = vrot.lane.b32.xlu0 %v693, 17
    %v717 = vpop.permute.xlu0 %716
    %v718 = vsel %vm130, %v715, %v717
    %v719 = vsel %vm130, %v713, %v715
    %v720 = vsel %vm130, %v711, %v713
    %v721 = vsel %vm130, %v717, %v711
    %v722 = vmul.f32 %v721, %v138
    %v723 = vmul.f32 %v720, %v142
    %v724 = vmul.f32 %v719, %v146
    %v725 = vmul.f32 %v718, %v150
    %726 = vrot.lane.b32.xlu0 %v690, 16
    %v727 = vpop.permute.xlu0 %726
    %728 = vrot.lane.b32.xlu0 %v691, 16
    %v729 = vpop.permute.xlu0 %728
    %730 = vrot.lane.b32.xlu0 %v692, 16
    %v731 = vpop.permute.xlu0 %730
    %732 = vrot.lane.b32.xlu0 %v693, 16
    %v733 = vpop.permute.xlu0 %732
    %v734 = vsel %vm163, %v731, %v733
    %v735 = vsel %vm163, %v729, %v731
    %v736 = vsel %vm163, %v727, %v729
    %v737 = vsel %vm163, %v733, %v727
    %v738 = vmul.f32 %v737, %v171
    %v739 = vmul.f32 %v736, %v175
    %v740 = vmul.f32 %v735, %v179
    %v741 = vmul.f32 %v734, %v183
    %742 = vrot.lane.b32.xlu0 %v690, 15
    %v743 = vpop.permute.xlu0 %742
    %744 = vrot.lane.b32.xlu0 %v691, 15
    %v745 = vpop.permute.xlu0 %744
    %746 = vrot.lane.b32.xlu0 %v692, 15
    %v747 = vpop.permute.xlu0 %746
    %748 = vrot.lane.b32.xlu0 %v693, 15
    %v749 = vpop.permute.xlu0 %748
    %v750 = vsel %vm196, %v747, %v749
    %v751 = vsel %vm196, %v745, %v747
    %v752 = vsel %vm196, %v743, %v745
    %v753 = vsel %vm196, %v749, %v743
    %v754 = vmul.f32 %v753, %v204
    %v755 = vmul.f32 %v752, %v208
    %v756 = vmul.f32 %v751, %v212
    %v757 = vmul.f32 %v750, %v216
    %758 = vrot.lane.b32.xlu0 %v690, 1
    %v759 = vpop.permute.xlu0 %758
    %760 = vrot.lane.b32.xlu0 %v691, 1
    %v761 = vpop.permute.xlu0 %760
    %762 = vrot.lane.b32.xlu0 %v692, 1
    %v763 = vpop.permute.xlu0 %762
    %764 = vrot.lane.b32.xlu0 %v693, 1
    %v765 = vpop.permute.xlu0 %764
    %v766 = vsel %vm229, %v763, %v765
    %v767 = vsel %vm229, %v761, %v763
    %v768 = vsel %vm229, %v759, %v761
    %v769 = vsel %vm229, %v765, %v759
    %v770 = vmul.f32 %v769, %v237
    %v771 = vmul.f32 %v768, %v241
    %v772 = vmul.f32 %v767, %v245
    %v773 = vmul.f32 %v766, %v249
    %v774 = vmul.f32 %v690, %v257
    %v775 = vmul.f32 %v691, %v261
    %v776 = vmul.f32 %v692, %v265
    %v777 = vmul.f32 %v693, %v269
    %778 = vrot.lane.b32.xlu0 %v690, 127
    %v779 = vpop.permute.xlu0 %778
    %780 = vrot.lane.b32.xlu0 %v691, 127
    %v781 = vpop.permute.xlu0 %780
    %782 = vrot.lane.b32.xlu0 %v692, 127
    %v783 = vpop.permute.xlu0 %782
    %784 = vrot.lane.b32.xlu0 %v693, 127
    %v785 = vpop.permute.xlu0 %784
    %v786 = vsel %vm288, %v783, %v785
    %v787 = vsel %vm288, %v781, %v783
    %v788 = vsel %vm288, %v779, %v781
    %v789 = vsel %vm288, %v785, %v779
    %v790 = vmul.f32 %v788, %v296
    %v791 = vmul.f32 %v787, %v300
    %v792 = vmul.f32 %v786, %v304
    %v793 = vmul.f32 %v789, %v308
    %794 = vrot.lane.b32.xlu0 %v690, 113
    %v795 = vpop.permute.xlu0 %794
    %796 = vrot.lane.b32.xlu0 %v691, 113
    %v797 = vpop.permute.xlu0 %796
    %798 = vrot.lane.b32.xlu0 %v692, 113
    %v799 = vpop.permute.xlu0 %798
    %800 = vrot.lane.b32.xlu0 %v693, 113
    %v801 = vpop.permute.xlu0 %800
    %v802 = vsel %vm321, %v799, %v801
    %v803 = vsel %vm321, %v797, %v799
    %v804 = vsel %vm321, %v795, %v797
    %v805 = vsel %vm321, %v801, %v795
    %v806 = vmul.f32 %v804, %v329
    %v807 = vmul.f32 %v803, %v333
    %v808 = vmul.f32 %v802, %v337
    %v809 = vmul.f32 %v805, %v341
    %810 = vrot.lane.b32.xlu0 %v690, 112
    %v811 = vpop.permute.xlu0 %810
    %812 = vrot.lane.b32.xlu0 %v691, 112
    %v813 = vpop.permute.xlu0 %812
    %814 = vrot.lane.b32.xlu0 %v692, 112
    %v815 = vpop.permute.xlu0 %814
    %816 = vrot.lane.b32.xlu0 %v693, 112
    %v817 = vpop.permute.xlu0 %816
    %v818 = vsel %vm354, %v815, %v817
    %v819 = vsel %vm354, %v813, %v815
    %v820 = vsel %vm354, %v811, %v813
    %v821 = vsel %vm354, %v817, %v811
    %v822 = vmul.f32 %v820, %v362
    %v823 = vmul.f32 %v819, %v366
    %v824 = vmul.f32 %v818, %v370
    %v825 = vmul.f32 %v821, %v374
    %826 = vrot.lane.b32.xlu0 %v690, 111
    %v827 = vpop.permute.xlu0 %826
    %828 = vrot.lane.b32.xlu0 %v691, 111
    %v829 = vpop.permute.xlu0 %828
    %830 = vrot.lane.b32.xlu0 %v692, 111
    %v831 = vpop.permute.xlu0 %830
    %832 = vrot.lane.b32.xlu0 %v693, 111
    %v833 = vpop.permute.xlu0 %832
    %v834 = vsel %vm387, %v831, %v833
    %v835 = vsel %vm387, %v829, %v831
    %v836 = vsel %vm387, %v827, %v829
    %v837 = vsel %vm387, %v833, %v827
    %v838 = vmul.f32 %v836, %v395
    %v839 = vmul.f32 %v835, %v399
    %v840 = vmul.f32 %v834, %v403
    %v841 = vmul.f32 %v837, %v407
    %v846 = vrot.slane %v738, 4
    %v847 = vrot.slane %v739, 4
    %v848 = vrot.slane %v740, 4
    %v849 = vrot.slane %v741, 4
    %v858 = vrot.slane %v770, 4
    %v859 = vrot.slane %v771, 4
    %v860 = vrot.slane %v772, 4
    %v861 = vrot.slane %v773, 4
    %v870 = vrot.slane %v790, 4
    %v871 = vrot.slane %v791, 4
    %v872 = vrot.slane %v792, 4
    %v873 = vrot.slane %v793, 4
    %v882 = vrot.slane %v822, 4
    %v883 = vrot.slane %v823, 4
    %v884 = vrot.slane %v824, 4
    %v885 = vrot.slane %v825, 4
    %v890 = vsel %vm466, %v722, %v846
    %v891 = vsel %vm466, %v723, %v847
    %v892 = vsel %vm466, %v724, %v848
    %v893 = vsel %vm466, %v725, %v849
    %v894 = vsel %vm466, %v754, %v858
    %v895 = vsel %vm466, %v755, %v859
    %v896 = vsel %vm466, %v756, %v860
    %v897 = vsel %vm466, %v757, %v861
    %v898 = vsel %vm466, %v774, %v870
    %v899 = vsel %vm466, %v775, %v871
    %v900 = vsel %vm466, %v776, %v872
    %v901 = vsel %vm466, %v777, %v873
    %v902 = vsel %vm466, %v806, %v882
    %v903 = vsel %vm466, %v807, %v883
    %v904 = vsel %vm466, %v808, %v884
    %v905 = vsel %vm466, %v809, %v885
    %v926 = vrot.slane %v890, 4
    %v927 = vrot.slane %v891, 4
    %v928 = vrot.slane %v892, 4
    %v929 = vrot.slane %v893, 4
    %v930 = vrot.slane %v894, 4
    %v931 = vsel %vm466, %v926, %v930
    %v932 = vrot.slane %v895, 4
    %v933 = vsel %vm466, %v927, %v932
    %v934 = vrot.slane %v896, 4
    %v935 = vsel %vm466, %v928, %v934
    %v936 = vrot.slane %v897, 4
    %v937 = vsel %vm466, %v929, %v936
    %v938 = vrot.slane %v898, 4
    %v939 = vsel %vm466, %v930, %v938
    %v940 = vrot.slane %v899, 4
    %v941 = vsel %vm466, %v932, %v940
    %v942 = vrot.slane %v900, 4
    %v943 = vsel %vm466, %v934, %v942
    %v944 = vrot.slane %v901, 4
    %v945 = vsel %vm466, %v936, %v944
    %v946 = vrot.slane %v902, 4
    %v947 = vsel %vm466, %v938, %v946
    %v948 = vrot.slane %v903, 4
    %v949 = vsel %vm466, %v940, %v948
    %v950 = vrot.slane %v904, 4
    %v951 = vsel %vm466, %v942, %v950
    %v952 = vrot.slane %v905, 4
    %v953 = vsel %vm466, %v944, %v952
    %v954 = vrot.slane %v838, 4
    %v955 = vsel %vm466, %v946, %v954
    %v956 = vrot.slane %v839, 4
    %v957 = vsel %vm466, %v948, %v956
    %v958 = vrot.slane %v840, 4
    %v959 = vsel %vm466, %v950, %v958
    %v960 = vrot.slane %v841, 4
    %v961 = vsel %vm466, %v952, %v960
    %v982 = vsel %vm466, %v408, %v926
    %v983 = vsel %vm466, %v409, %v927
    %v984 = vsel %vm466, %v410, %v928
    %v985 = vsel %vm466, %v411, %v929
    %vm986 = vcmask 588800
    %v988 = vsel %vm986, %v109, 0
    %990 = vmatprep.subr.mxu0 %v468
    %991 = vmatpush1.msra.mxu0 %v467
    %992 = vmatprep.subr.mxu0 %v472
    %993 = vmatpush1.msra.mxu0 %v471
    %994 = vmatprep.subr.mxu0 %v476
    %995 = vmatpush1.msra.mxu0 %v475
    %996 = vmatprep.subr.mxu0 %v480
    %997 = vmatpush1.msra.mxu0 %v479
    %998 = vmatprep.subr.mxu0 %v983
    %999 = vmatpush1.msra.mxu0 %v982
    %1000 = vmatprep.subr.mxu0 %v933
    %1001 = vmatpush1.msra.mxu0 %v931
    %1002 = vmatprep.subr.mxu0 %v941
    %1003 = vmatpush1.msra.mxu0 %v939
    %1004 = vmatprep.subr.mxu0 %v949
    %1005 = vmatpush1.msra.mxu0 %v947
    %1006 = vmatprep.subr.mxu0 %v957
    %1007 = vmatpush1.msra.mxu0 %v955
    %1008 = vmatprep.subr.mxu0 0.0
    %1009 = vmatpush1.msra.mxu0 0.0
    %1010 = vmatprep.subr.mxu0 0.0
    %1011 = vmatpush1.msra.mxu0 0.0
    %1012 = vmatprep.subr.mxu0 0.0
    %1013 = vmatpush1.msra.mxu0 0.0
    %1014 = vmatprep.subr.mxu0 0.0
    %1015 = vmatpush1.msra.mxu0 0.0
    %1016 = vmatprep.subr.mxu0 0.0
    %1017 = vmatpush1.msra.mxu0 0.0
    %1018 = vmatprep.subr.mxu0 0.0
    %1019 = vmatpush1.msra.mxu0 0.0
    %1020 = vmatprep.subr.mxu0 0.0
    %1021 = vmatpush1.msra.mxu0 0.0
    %1022 = vmatprep.subr.mxu0 0.0
    %1023 = vmatpush1.msra.mxu0 0.0
    %1024 = vmatprep.subr.mxu0 0.0
    %1025 = vmatpush1.msra.mxu0 0.0
    %1026 = vmatprep.subr.mxu0 0.0
    %1027 = vmatpush1.msra.mxu0 0.0
    %1028 = vmatprep.subr.mxu0 0.0
    %1029 = vmatpush1.msra.mxu0 0.0
    %1030 = vmatprep.subr.mxu0 0.0
    %1031 = vmatpush1.msra.mxu0 0.0
    %1032 = vmatprep.subr.mxu0 0.0
    %1033 = vmatpush1.msra.mxu0 0.0
    %1034 = vmatprep.subr.mxu0 0.0
    %1035 = vmatpush1.msra.mxu0 0.0
    %1036 = vmatprep.subr.mxu0 0.0
    %1037 = vmatpush1.msra.mxu0 0.0
    %1038 = vmatprep.subr.mxu0 0.0
    %1039 = vmatpush1.msra.mxu0 0.0
    %1040 = vmatprep.subr.mxu0 0.0
    %1041 = vmatpush1.msra.mxu0 0.0
    %1042 = vmatprep.subr.mxu0 0.0
    %1043 = vmatpush1.msra.mxu0 0.0
    %1044 = vmatprep.subr.mxu0 0.0
    %1045 = vmatpush1.msra.mxu0 0.0
    %1046 = vmatprep.subr.mxu0 0.0
    %1047 = vmatpush1.msra.mxu0 0.0
    %1048 = vmatprep.subr.mxu0 0.0
    %1049 = vmatpush1.msra.mxu0 0.0
    %1050 = vmatprep.subr.mxu0 0.0
    %1051 = vmatpush1.msra.mxu0 0.0
    %1052 = vmatprep.subr.mxu0 0.0
    %1053 = vmatpush1.msra.mxu0 0.0
    %1054 = vmatprep.mubr.f32.mxu0 0.0
    %1055 = vmatmul.mubr.f32.gmra.mrb[0].mxu0 %v988
    %v1056 = vpop.f32.mrb[0].mxu0
    %v1057 = vadd.f32 0.0, %v1056
    %v1058 = vpop.f32.mrb[0].mxu0
    %v1059 = vadd.f32 0.0, %v1058
    %1060 = vdwg.mxu0
    %1061 = vmatprep.subr.mxu0 %v470
    %1062 = vmatpush1.msra.mxu0 %v469
    %1063 = vmatprep.subr.mxu0 %v474
    %1064 = vmatpush1.msra.mxu0 %v473
    %1065 = vmatprep.subr.mxu0 %v478
    %1066 = vmatpush1.msra.mxu0 %v477
    %1067 = vmatprep.subr.mxu0 %v482
    %1068 = vmatpush1.msra.mxu0 %v481
    %1069 = vmatprep.subr.mxu0 %v985
    %1070 = vmatpush1.msra.mxu0 %v984
    %1071 = vmatprep.subr.mxu0 %v937
    %1072 = vmatpush1.msra.mxu0 %v935
    %1073 = vmatprep.subr.mxu0 %v945
    %1074 = vmatpush1.msra.mxu0 %v943
    %1075 = vmatprep.subr.mxu0 %v953
    %1076 = vmatpush1.msra.mxu0 %v951
    %1077 = vmatprep.subr.mxu0 %v961
    %1078 = vmatpush1.msra.mxu0 %v959
    %1079 = vmatprep.subr.mxu0 0.0
    %1080 = vmatpush1.msra.mxu0 0.0
    %1081 = vmatprep.subr.mxu0 0.0
    %1082 = vmatpush1.msra.mxu0 0.0
    %1083 = vmatprep.subr.mxu0 0.0
    %1084 = vmatpush1.msra.mxu0 0.0
    %1085 = vmatprep.subr.mxu0 0.0
    %1086 = vmatpush1.msra.mxu0 0.0
    %1087 = vmatprep.subr.mxu0 0.0
    %1088 = vmatpush1.msra.mxu0 0.0
    %1089 = vmatprep.subr.mxu0 0.0
    %1090 = vmatpush1.msra.mxu0 0.0
    %1091 = vmatprep.subr.mxu0 0.0
    %1092 = vmatpush1.msra.mxu0 0.0
    %1093 = vmatprep.subr.mxu0 0.0
    %1094 = vmatpush1.msra.mxu0 0.0
    %1095 = vmatprep.subr.mxu0 0.0
    %1096 = vmatpush1.msra.mxu0 0.0
    %1097 = vmatprep.subr.mxu0 0.0
    %1098 = vmatpush1.msra.mxu0 0.0
    %1099 = vmatprep.subr.mxu0 0.0
    %1100 = vmatpush1.msra.mxu0 0.0
    %1101 = vmatprep.subr.mxu0 0.0
    %1102 = vmatpush1.msra.mxu0 0.0
    %1103 = vmatprep.subr.mxu0 0.0
    %1104 = vmatpush1.msra.mxu0 0.0
    %1105 = vmatprep.subr.mxu0 0.0
    %1106 = vmatpush1.msra.mxu0 0.0
    %1107 = vmatprep.subr.mxu0 0.0
    %1108 = vmatpush1.msra.mxu0 0.0
    %1109 = vmatprep.subr.mxu0 0.0
    %1110 = vmatpush1.msra.mxu0 0.0
    %1111 = vmatprep.subr.mxu0 0.0
    %1112 = vmatpush1.msra.mxu0 0.0
    %1113 = vmatprep.subr.mxu0 0.0
    %1114 = vmatpush1.msra.mxu0 0.0
    %1115 = vmatprep.subr.mxu0 0.0
    %1116 = vmatpush1.msra.mxu0 0.0
    %1117 = vmatprep.subr.mxu0 0.0
    %1118 = vmatpush1.msra.mxu0 0.0
    %1119 = vmatprep.subr.mxu0 0.0
    %1120 = vmatpush1.msra.mxu0 0.0
    %1121 = vmatprep.subr.mxu0 0.0
    %1122 = vmatpush1.msra.mxu0 0.0
    %1123 = vmatprep.subr.mxu0 0.0
    %1124 = vmatpush1.msra.mxu0 0.0
    %1125 = vmatprep.mubr.f32.mxu0 0.0
    %1126 = vmatmul.mubr.f32.gmra.mrb[0].mxu0 %v988
    %v1127 = vpop.f32.mrb[0].mxu0
    %v1128 = vadd.f32 0.0, %v1127
    %v1129 = vpop.f32.mrb[0].mxu0
    %v1130 = vadd.f32 0.0, %v1129
    %1131 = vdwg.mxu0
    %v1132 = vsel %vm466, %v1057, 0.0
    %v1133 = vsel %vm466, %v1059, 0.0
    %v1134 = vadd.f32 %v1132, %v1133
    %v1135 = vsel %vm466, %v1128, 0.0
    %v1136 = vadd.f32 %v1134, %v1135
    %v1137 = vsel %vm466, %v1130, 0.0
    %v1138 = vadd.f32 %v1136, %v1137
    %1139 = vadd.xlane.f32.xlu0 %v1138
    %v1140 = vpop.xlane.xlu0 %1139
    %v1141 = vmul.f32 %v1140, 0.001953125
    %v1142 = vsub.f32 %v1057, %v1141
    %v1143 = vsub.f32 %v1059, %v1141
    %v1144 = vsub.f32 %v1128, %v1141
    %v1145 = vsub.f32 %v1130, %v1141
    %v1146 = vmul.f32 %v1142, %v1142
    %v1147 = vmul.f32 %v1143, %v1143
    %v1148 = vmul.f32 %v1144, %v1144
    %v1149 = vmul.f32 %v1145, %v1145
    %v1150 = vsel %vm466, %v1146, 0.0
    %v1151 = vsel %vm466, %v1147, 0.0
    %v1152 = vadd.f32 %v1150, %v1151
    %v1153 = vsel %vm466, %v1148, 0.0
    %v1154 = vadd.f32 %v1152, %v1153
    %v1155 = vsel %vm466, %v1149, 0.0
    %v1156 = vadd.f32 %v1154, %v1155
    %1157 = vadd.xlane.f32.xlu0 %v1156
    %v1158 = vpop.xlane.xlu0 %1157
    %v1159 = vmul.f32 %v1158, 0.001953125
    %v1160 = vadd.f32 %v1159, 1e-05
    %v1161 = vrsqrt.pop %v1160
    %v1162 = vmul.f32 %v111, %v1161
    %1164 = vset.pattern.permute.xlu0 2
    %1165 = vperm.xlu0 %1164, %v1162
    %v1166 = vpop.permute.xlu0 %1165
    %v1168 = vmul.f32 %v1142, %v1166
    %v1169 = vmul.f32 %v1143, %v1166
    %v1170 = vmul.f32 %v1144, %v1166
    %v1171 = vmul.f32 %v1145, %v1166
    %1172 = vset.pattern.permute.xlu0 3
    %1173 = vperm.xlu0 %1172, %v111
    %v1174 = vpop.permute.xlu0 %1173
    %v1176 = vadd.f32 %v1168, %v1174
    %v1177 = vadd.f32 %v1169, %v1174
    %v1178 = vadd.f32 %v1170, %v1174
    %v1179 = vadd.f32 %v1171, %v1174
    %v1180 = vmax.f32 %v1176, 0.0
    %v1181 = vmax.f32 %v1177, 0.0
    %v1182 = vmax.f32 %v1178, 0.0
    %v1183 = vmax.f32 %v1179, 0.0
    %1184 = vrot.lane.b32.xlu0 %v1180, 17
    %v1185 = vpop.permute.xlu0 %1184
    %1186 = vrot.lane.b32.xlu0 %v1181, 17
    %v1187 = vpop.permute.xlu0 %1186
    %1188 = vrot.lane.b32.xlu0 %v1182, 17
    %v1189 = vpop.permute.xlu0 %1188
    %1190 = vrot.lane.b32.xlu0 %v1183, 17
    %v1191 = vpop.permute.xlu0 %1190
    %v1192 = vsel %vm130, %v1189, %v1191
    %v1193 = vsel %vm130, %v1187, %v1189
    %v1194 = vsel %vm130, %v1185, %v1187
    %v1195 = vsel %vm130, %v1191, %v1185
    %v1196 = vmul.f32 %v1195, %v138
    %v1197 = vmul.f32 %v1194, %v142
    %v1198 = vmul.f32 %v1193, %v146
    %v1199 = vmul.f32 %v1192, %v150
    %1200 = vrot.lane.b32.xlu0 %v1180, 16
    %v1201 = vpop.permute.xlu0 %1200
    %1202 = vrot.lane.b32.xlu0 %v1181, 16
    %v1203 = vpop.permute.xlu0 %1202
    %1204 = vrot.lane.b32.xlu0 %v1182, 16
    %v1205 = vpop.permute.xlu0 %1204
    %1206 = vrot.lane.b32.xlu0 %v1183, 16
    %v1207 = vpop.permute.xlu0 %1206
    %v1208 = vsel %vm163, %v1205, %v1207
    %v1209 = vsel %vm163, %v1203, %v1205
    %v1210 = vsel %vm163, %v1201, %v1203
    %v1211 = vsel %vm163, %v1207, %v1201
    %v1212 = vmul.f32 %v1211, %v171
    %v1213 = vmul.f32 %v1210, %v175
    %v1214 = vmul.f32 %v1209, %v179
    %v1215 = vmul.f32 %v1208, %v183
    %1216 = vrot.lane.b32.xlu0 %v1180, 15
    %v1217 = vpop.permute.xlu0 %1216
    %1218 = vrot.lane.b32.xlu0 %v1181, 15
    %v1219 = vpop.permute.xlu0 %1218
    %1220 = vrot.lane.b32.xlu0 %v1182, 15
    %v1221 = vpop.permute.xlu0 %1220
    %1222 = vrot.lane.b32.xlu0 %v1183, 15
    %v1223 = vpop.permute.xlu0 %1222
    %v1224 = vsel %vm196, %v1221, %v1223
    %v1225 = vsel %vm196, %v1219, %v1221
    %v1226 = vsel %vm196, %v1217, %v1219
    %v1227 = vsel %vm196, %v1223, %v1217
    %v1228 = vmul.f32 %v1227, %v204
    %v1229 = vmul.f32 %v1226, %v208
    %v1230 = vmul.f32 %v1225, %v212
    %v1231 = vmul.f32 %v1224, %v216
    %1232 = vrot.lane.b32.xlu0 %v1180, 1
    %v1233 = vpop.permute.xlu0 %1232
    %1234 = vrot.lane.b32.xlu0 %v1181, 1
    %v1235 = vpop.permute.xlu0 %1234
    %1236 = vrot.lane.b32.xlu0 %v1182, 1
    %v1237 = vpop.permute.xlu0 %1236
    %1238 = vrot.lane.b32.xlu0 %v1183, 1
    %v1239 = vpop.permute.xlu0 %1238
    %v1240 = vsel %vm229, %v1237, %v1239
    %v1241 = vsel %vm229, %v1235, %v1237
    %v1242 = vsel %vm229, %v1233, %v1235
    %v1243 = vsel %vm229, %v1239, %v1233
    %v1244 = vmul.f32 %v1243, %v237
    %v1245 = vmul.f32 %v1242, %v241
    %v1246 = vmul.f32 %v1241, %v245
    %v1247 = vmul.f32 %v1240, %v249
    %v1248 = vmul.f32 %v1180, %v257
    %v1249 = vmul.f32 %v1181, %v261
    %v1250 = vmul.f32 %v1182, %v265
    %v1251 = vmul.f32 %v1183, %v269
    %1252 = vrot.lane.b32.xlu0 %v1180, 127
    %v1253 = vpop.permute.xlu0 %1252
    %1254 = vrot.lane.b32.xlu0 %v1181, 127
    %v1255 = vpop.permute.xlu0 %1254
    %1256 = vrot.lane.b32.xlu0 %v1182, 127
    %v1257 = vpop.permute.xlu0 %1256
    %1258 = vrot.lane.b32.xlu0 %v1183, 127
    %v1259 = vpop.permute.xlu0 %1258
    %v1260 = vsel %vm288, %v1257, %v1259
    %v1261 = vsel %vm288, %v1255, %v1257
    %v1262 = vsel %vm288, %v1253, %v1255
    %v1263 = vsel %vm288, %v1259, %v1253
    %v1264 = vmul.f32 %v1262, %v296
    %v1265 = vmul.f32 %v1261, %v300
    %v1266 = vmul.f32 %v1260, %v304
    %v1267 = vmul.f32 %v1263, %v308
    %1268 = vrot.lane.b32.xlu0 %v1180, 113
    %v1269 = vpop.permute.xlu0 %1268
    %1270 = vrot.lane.b32.xlu0 %v1181, 113
    %v1271 = vpop.permute.xlu0 %1270
    %1272 = vrot.lane.b32.xlu0 %v1182, 113
    %v1273 = vpop.permute.xlu0 %1272
    %1274 = vrot.lane.b32.xlu0 %v1183, 113
    %v1275 = vpop.permute.xlu0 %1274
    %v1276 = vsel %vm321, %v1273, %v1275
    %v1277 = vsel %vm321, %v1271, %v1273
    %v1278 = vsel %vm321, %v1269, %v1271
    %v1279 = vsel %vm321, %v1275, %v1269
    %v1280 = vmul.f32 %v1278, %v329
    %v1281 = vmul.f32 %v1277, %v333
    %v1282 = vmul.f32 %v1276, %v337
    %v1283 = vmul.f32 %v1279, %v341
    %1284 = vrot.lane.b32.xlu0 %v1180, 112
    %v1285 = vpop.permute.xlu0 %1284
    %1286 = vrot.lane.b32.xlu0 %v1181, 112
    %v1287 = vpop.permute.xlu0 %1286
    %1288 = vrot.lane.b32.xlu0 %v1182, 112
    %v1289 = vpop.permute.xlu0 %1288
    %1290 = vrot.lane.b32.xlu0 %v1183, 112
    %v1291 = vpop.permute.xlu0 %1290
    %v1292 = vsel %vm354, %v1289, %v1291
    %v1293 = vsel %vm354, %v1287, %v1289
    %v1294 = vsel %vm354, %v1285, %v1287
    %v1295 = vsel %vm354, %v1291, %v1285
    %v1296 = vmul.f32 %v1294, %v362
    %v1297 = vmul.f32 %v1293, %v366
    %v1298 = vmul.f32 %v1292, %v370
    %v1299 = vmul.f32 %v1295, %v374
    %1300 = vrot.lane.b32.xlu0 %v1180, 111
    %v1301 = vpop.permute.xlu0 %1300
    %1302 = vrot.lane.b32.xlu0 %v1181, 111
    %v1303 = vpop.permute.xlu0 %1302
    %1304 = vrot.lane.b32.xlu0 %v1182, 111
    %v1305 = vpop.permute.xlu0 %1304
    %1306 = vrot.lane.b32.xlu0 %v1183, 111
    %v1307 = vpop.permute.xlu0 %1306
    %v1308 = vsel %vm387, %v1305, %v1307
    %v1309 = vsel %vm387, %v1303, %v1305
    %v1310 = vsel %vm387, %v1301, %v1303
    %v1311 = vsel %vm387, %v1307, %v1301
    %v1312 = vmul.f32 %v1310, %v395
    %v1313 = vmul.f32 %v1309, %v399
    %v1314 = vmul.f32 %v1308, %v403
    %v1315 = vmul.f32 %v1311, %v407
    %v1320 = vrot.slane %v1212, 4
    %v1321 = vrot.slane %v1213, 4
    %v1322 = vrot.slane %v1214, 4
    %v1323 = vrot.slane %v1215, 4
    %v1332 = vrot.slane %v1244, 4
    %v1333 = vrot.slane %v1245, 4
    %v1334 = vrot.slane %v1246, 4
    %v1335 = vrot.slane %v1247, 4
    %v1344 = vrot.slane %v1264, 4
    %v1345 = vrot.slane %v1265, 4
    %v1346 = vrot.slane %v1266, 4
    %v1347 = vrot.slane %v1267, 4
    %v1356 = vrot.slane %v1296, 4
    %v1357 = vrot.slane %v1297, 4
    %v1358 = vrot.slane %v1298, 4
    %v1359 = vrot.slane %v1299, 4
    %v1364 = vsel %vm466, %v1196, %v1320
    %v1365 = vsel %vm466, %v1197, %v1321
    %v1366 = vsel %vm466, %v1198, %v1322
    %v1367 = vsel %vm466, %v1199, %v1323
    %v1368 = vsel %vm466, %v1228, %v1332
    %v1369 = vsel %vm466, %v1229, %v1333
    %v1370 = vsel %vm466, %v1230, %v1334
    %v1371 = vsel %vm466, %v1231, %v1335
    %v1372 = vsel %vm466, %v1248, %v1344
    %v1373 = vsel %vm466, %v1249, %v1345
    %v1374 = vsel %vm466, %v1250, %v1346
    %v1375 = vsel %vm466, %v1251, %v1347
    %v1376 = vsel %vm466, %v1280, %v1356
    %v1377 = vsel %vm466, %v1281, %v1357
    %v1378 = vsel %vm466, %v1282, %v1358
    %v1379 = vsel %vm466, %v1283, %v1359
    %vm1380 = vcmask 883712
    %v1382 = vsel %vm1380, %v110, 0
    %v1385 = vsel %vm466, %v1312, 0
    %v1388 = vsel %vm466, %v1313, 0
    %v1391 = vsel %vm466, %v1314, 0
    %v1394 = vsel %vm466, %v1315, 0
    %1396 = vmatprep.subr.mxu0 %v468
    %1397 = vmatpush1.msra.mxu0 %v467
    %1398 = vmatprep.subr.mxu0 %v472
    %1399 = vmatpush1.msra.mxu0 %v471
    %1400 = vmatprep.subr.mxu0 %v476
    %1401 = vmatpush1.msra.mxu0 %v475
    %1402 = vmatprep.subr.mxu0 %v480
    %1403 = vmatpush1.msra.mxu0 %v479
    %1404 = vmatprep.subr.mxu0 %v983
    %1405 = vmatpush1.msra.mxu0 %v982
    %1406 = vmatprep.subr.mxu0 %v933
    %1407 = vmatpush1.msra.mxu0 %v931
    %1408 = vmatprep.subr.mxu0 %v941
    %1409 = vmatpush1.msra.mxu0 %v939
    %1410 = vmatprep.subr.mxu0 %v949
    %1411 = vmatpush1.msra.mxu0 %v947
    %1412 = vmatprep.subr.mxu0 %v957
    %1413 = vmatpush1.msra.mxu0 %v955
    %1414 = vmatprep.subr.mxu0 %v1365
    %1415 = vmatpush1.msra.mxu0 %v1364
    %1416 = vmatprep.subr.mxu0 %v1369
    %1417 = vmatpush1.msra.mxu0 %v1368
    %1418 = vmatprep.subr.mxu0 %v1373
    %1419 = vmatpush1.msra.mxu0 %v1372
    %1420 = vmatprep.subr.mxu0 %v1377
    %1421 = vmatpush1.msra.mxu0 %v1376
    %1422 = vmatprep.subr.mxu0 %v1388
    %1423 = vmatpush1.msra.mxu0 %v1385
    %1424 = vmatprep.subr.mxu0 0.0
    %1425 = vmatpush1.msra.mxu0 0.0
    %1426 = vmatprep.subr.mxu0 0.0
    %1427 = vmatpush1.msra.mxu0 0.0
    %1428 = vmatprep.subr.mxu0 0.0
    %1429 = vmatpush1.msra.mxu0 0.0
    %1430 = vmatprep.subr.mxu0 0.0
    %1431 = vmatpush1.msra.mxu0 0.0
    %1432 = vmatprep.subr.mxu0 0.0
    %1433 = vmatpush1.msra.mxu0 0.0
    %1434 = vmatprep.subr.mxu0 0.0
    %1435 = vmatpush1.msra.mxu0 0.0
    %1436 = vmatprep.subr.mxu0 0.0
    %1437 = vmatpush1.msra.mxu0 0.0
    %1438 = vmatprep.subr.mxu0 0.0
    %1439 = vmatpush1.msra.mxu0 0.0
    %1440 = vmatprep.subr.mxu0 0.0
    %1441 = vmatpush1.msra.mxu0 0.0
    %1442 = vmatprep.subr.mxu0 0.0
    %1443 = vmatpush1.msra.mxu0 0.0
    %1444 = vmatprep.subr.mxu0 0.0
    %1445 = vmatpush1.msra.mxu0 0.0
    %1446 = vmatprep.subr.mxu0 0.0
    %1447 = vmatpush1.msra.mxu0 0.0
    %1448 = vmatprep.subr.mxu0 0.0
    %1449 = vmatpush1.msra.mxu0 0.0
    %1450 = vmatprep.subr.mxu0 0.0
    %1451 = vmatpush1.msra.mxu0 0.0
    %1452 = vmatprep.subr.mxu0 0.0
    %1453 = vmatpush1.msra.mxu0 0.0
    %1454 = vmatprep.subr.mxu0 0.0
    %1455 = vmatpush1.msra.mxu0 0.0
    %1456 = vmatprep.subr.mxu0 0.0
    %1457 = vmatpush1.msra.mxu0 0.0
    %1458 = vmatprep.subr.mxu0 0.0
    %1459 = vmatpush1.msra.mxu0 0.0
    %1460 = vmatprep.mubr.f32.mxu0 0.0
    %1461 = vmatmul.mubr.f32.gmra.mrb[0].mxu0 %v1382
    %v1462 = vpop.f32.mrb[0].mxu0
    %v1463 = vadd.f32 0.0, %v1462
    %v1464 = vpop.f32.mrb[0].mxu0
    %v1465 = vadd.f32 0.0, %v1464
    %1466 = vdwg.mxu0
    %1467 = vmatprep.subr.mxu0 %v470
    %1468 = vmatpush1.msra.mxu0 %v469
    %1469 = vmatprep.subr.mxu0 %v474
    %1470 = vmatpush1.msra.mxu0 %v473
    %1471 = vmatprep.subr.mxu0 %v478
    %1472 = vmatpush1.msra.mxu0 %v477
    %1473 = vmatprep.subr.mxu0 %v482
    %1474 = vmatpush1.msra.mxu0 %v481
    %1475 = vmatprep.subr.mxu0 %v985
    %1476 = vmatpush1.msra.mxu0 %v984
    %1477 = vmatprep.subr.mxu0 %v937
    %1478 = vmatpush1.msra.mxu0 %v935
    %1479 = vmatprep.subr.mxu0 %v945
    %1480 = vmatpush1.msra.mxu0 %v943
    %1481 = vmatprep.subr.mxu0 %v953
    %1482 = vmatpush1.msra.mxu0 %v951
    %1483 = vmatprep.subr.mxu0 %v961
    %1484 = vmatpush1.msra.mxu0 %v959
    %1485 = vmatprep.subr.mxu0 %v1367
    %1486 = vmatpush1.msra.mxu0 %v1366
    %1487 = vmatprep.subr.mxu0 %v1371
    %1488 = vmatpush1.msra.mxu0 %v1370
    %1489 = vmatprep.subr.mxu0 %v1375
    %1490 = vmatpush1.msra.mxu0 %v1374
    %1491 = vmatprep.subr.mxu0 %v1379
    %1492 = vmatpush1.msra.mxu0 %v1378
    %1493 = vmatprep.subr.mxu0 %v1394
    %1494 = vmatpush1.msra.mxu0 %v1391
    %1495 = vmatprep.subr.mxu0 0.0
    %1496 = vmatpush1.msra.mxu0 0.0
    %1497 = vmatprep.subr.mxu0 0.0
    %1498 = vmatpush1.msra.mxu0 0.0
    %1499 = vmatprep.subr.mxu0 0.0
    %1500 = vmatpush1.msra.mxu0 0.0
    %1501 = vmatprep.subr.mxu0 0.0
    %1502 = vmatpush1.msra.mxu0 0.0
    %1503 = vmatprep.subr.mxu0 0.0
    %1504 = vmatpush1.msra.mxu0 0.0
    %1505 = vmatprep.subr.mxu0 0.0
    %1506 = vmatpush1.msra.mxu0 0.0
    %1507 = vmatprep.subr.mxu0 0.0
    %1508 = vmatpush1.msra.mxu0 0.0
    %1509 = vmatprep.subr.mxu0 0.0
    %1510 = vmatpush1.msra.mxu0 0.0
    %1511 = vmatprep.subr.mxu0 0.0
    %1512 = vmatpush1.msra.mxu0 0.0
    %1513 = vmatprep.subr.mxu0 0.0
    %1514 = vmatpush1.msra.mxu0 0.0
    %1515 = vmatprep.subr.mxu0 0.0
    %1516 = vmatpush1.msra.mxu0 0.0
    %1517 = vmatprep.subr.mxu0 0.0
    %1518 = vmatpush1.msra.mxu0 0.0
    %1519 = vmatprep.subr.mxu0 0.0
    %1520 = vmatpush1.msra.mxu0 0.0
    %1521 = vmatprep.subr.mxu0 0.0
    %1522 = vmatpush1.msra.mxu0 0.0
    %1523 = vmatprep.subr.mxu0 0.0
    %1524 = vmatpush1.msra.mxu0 0.0
    %1525 = vmatprep.subr.mxu0 0.0
    %1526 = vmatpush1.msra.mxu0 0.0
    %1527 = vmatprep.subr.mxu0 0.0
    %1528 = vmatpush1.msra.mxu0 0.0
    %1529 = vmatprep.subr.mxu0 0.0
    %1530 = vmatpush1.msra.mxu0 0.0
    %1531 = vmatprep.mubr.f32.mxu0 0.0
    %1532 = vmatmul.mubr.f32.gmra.mrb[0].mxu0 %v1382
    %v1533 = vpop.f32.mrb[0].mxu0
    %v1534 = vadd.f32 0.0, %v1533
    %v1535 = vpop.f32.mrb[0].mxu0
    %v1536 = vadd.f32 0.0, %v1535
    %1537 = vdwg.mxu0
    %v1538 = vsel %vm466, %v1463, 0.0
    %v1539 = vsel %vm466, %v1465, 0.0
    %v1540 = vadd.f32 %v1538, %v1539
    %v1541 = vsel %vm466, %v1534, 0.0
    %v1542 = vadd.f32 %v1540, %v1541
    %v1543 = vsel %vm466, %v1536, 0.0
    %v1544 = vadd.f32 %v1542, %v1543
    %1545 = vadd.xlane.f32.xlu0 %v1544
    %v1546 = vpop.xlane.xlu0 %1545
    %v1547 = vmul.f32 %v1546, 0.001953125
    %v1548 = vsub.f32 %v1463, %v1547
    %v1549 = vsub.f32 %v1465, %v1547
    %v1550 = vsub.f32 %v1534, %v1547
    %v1551 = vsub.f32 %v1536, %v1547
    %v1552 = vmul.f32 %v1548, %v1548
    %v1553 = vmul.f32 %v1549, %v1549
    %v1554 = vmul.f32 %v1550, %v1550
    %v1555 = vmul.f32 %v1551, %v1551
    %v1556 = vsel %vm466, %v1552, 0.0
    %v1557 = vsel %vm466, %v1553, 0.0
    %v1558 = vadd.f32 %v1556, %v1557
    %v1559 = vsel %vm466, %v1554, 0.0
    %v1560 = vadd.f32 %v1558, %v1559
    %v1561 = vsel %vm466, %v1555, 0.0
    %v1562 = vadd.f32 %v1560, %v1561
    %1563 = vadd.xlane.f32.xlu0 %v1562
    %v1564 = vpop.xlane.xlu0 %1563
    %v1565 = vmul.f32 %v1564, 0.001953125
    %v1566 = vadd.f32 %v1565, 1e-05
    %v1567 = vrsqrt.pop %v1566
    %v1568 = vmul.f32 %v111, %v1567
    %1570 = vset.pattern.permute.xlu0 4
    %1571 = vperm.xlu0 %1570, %v1568
    %v1572 = vpop.permute.xlu0 %1571
    %v1574 = vmul.f32 %v1548, %v1572
    %v1575 = vmul.f32 %v1549, %v1572
    %v1576 = vmul.f32 %v1550, %v1572
    %v1577 = vmul.f32 %v1551, %v1572
    %1578 = vset.pattern.permute.xlu0 5
    %1579 = vperm.xlu0 %1578, %v111
    %v1580 = vpop.permute.xlu0 %1579
    %v1582 = vadd.f32 %v1574, %v1580
    %v1583 = vadd.f32 %v1575, %v1580
    %v1584 = vadd.f32 %v1576, %v1580
    %v1585 = vadd.f32 %v1577, %v1580
    %v1586 = vmax.f32 %v1582, 0.0
    %v1587 = vmax.f32 %v1583, 0.0
    %v1588 = vmax.f32 %v1584, 0.0
    %v1589 = vmax.f32 %v1585, 0.0
    %v1594 = vrot.slane %v1586, 4
    %v1595 = vrot.slane %v1587, 4
    %v1596 = vrot.slane %v1588, 4
    %v1597 = vrot.slane %v1589, 4
    %v1602 = vsel %vm466, %v1180, %v1594
    %v1603 = vsel %vm466, %v1181, %v1595
    %v1604 = vsel %vm466, %v1182, %v1596
    %v1605 = vsel %vm466, %v1183, %v1597
    %1607 = vset.pattern.permute.xlu0 0
    %1608 = vperm.xlu0 %1607, %v113
    %v1609 = vpop.permute.xlu0 %1608
    %vm1611 = vcmask 130048
    %v1613 = vsel %vm1611, %v112, 0
    %1615 = vmatprep.subr.mxu0 %v707
    %1616 = vmatpush1.msra.mxu0 %v706
    %1617 = vmatprep.subr.mxu0 %v1603
    %1618 = vmatpush1.msra.mxu0 %v1602
    %1619 = vmatprep.subr.mxu0 0.0
    %1620 = vmatpush1.msra.mxu0 0.0
    %1621 = vmatprep.subr.mxu0 0.0
    %1622 = vmatpush1.msra.mxu0 0.0
    %1623 = vmatprep.subr.mxu0 0.0
    %1624 = vmatpush1.msra.mxu0 0.0
    %1625 = vmatprep.subr.mxu0 0.0
    %1626 = vmatpush1.msra.mxu0 0.0
    %1627 = vmatprep.subr.mxu0 0.0
    %1628 = vmatpush1.msra.mxu0 0.0
    %1629 = vmatprep.subr.mxu0 0.0
    %1630 = vmatpush1.msra.mxu0 0.0
    %1631 = vmatprep.subr.mxu0 0.0
    %1632 = vmatpush1.msra.mxu0 0.0
    %1633 = vmatprep.subr.mxu0 0.0
    %1634 = vmatpush1.msra.mxu0 0.0
    %1635 = vmatprep.subr.mxu0 0.0
    %1636 = vmatpush1.msra.mxu0 0.0
    %1637 = vmatprep.subr.mxu0 0.0
    %1638 = vmatpush1.msra.mxu0 0.0
    %1639 = vmatprep.subr.mxu0 0.0
    %1640 = vmatpush1.msra.mxu0 0.0
    %1641 = vmatprep.subr.mxu0 0.0
    %1642 = vmatpush1.msra.mxu0 0.0
    %1643 = vmatprep.subr.mxu0 0.0
    %1644 = vmatpush1.msra.mxu0 0.0
    %1645 = vmatprep.subr.mxu0 0.0
    %1646 = vmatpush1.msra.mxu0 0.0
    %1647 = vmatprep.subr.mxu0 0.0
    %1648 = vmatpush1.msra.mxu0 0.0
    %1649 = vmatprep.subr.mxu0 0.0
    %1650 = vmatpush1.msra.mxu0 0.0
    %1651 = vmatprep.subr.mxu0 0.0
    %1652 = vmatpush1.msra.mxu0 0.0
    %1653 = vmatprep.subr.mxu0 0.0
    %1654 = vmatpush1.msra.mxu0 0.0
    %1655 = vmatprep.subr.mxu0 0.0
    %1656 = vmatpush1.msra.mxu0 0.0
    %1657 = vmatprep.subr.mxu0 0.0
    %1658 = vmatpush1.msra.mxu0 0.0
    %1659 = vmatprep.subr.mxu0 0.0
    %1660 = vmatpush1.msra.mxu0 0.0
    %1661 = vmatprep.subr.mxu0 0.0
    %1662 = vmatpush1.msra.mxu0 0.0
    %1663 = vmatprep.subr.mxu0 0.0
    %1664 = vmatpush1.msra.mxu0 0.0
    %1665 = vmatprep.subr.mxu0 0.0
    %1666 = vmatpush1.msra.mxu0 0.0
    %1667 = vmatprep.subr.mxu0 0.0
    %1668 = vmatpush1.msra.mxu0 0.0
    %1669 = vmatprep.subr.mxu0 0.0
    %1670 = vmatpush1.msra.mxu0 0.0
    %1671 = vmatprep.subr.mxu0 0.0
    %1672 = vmatpush1.msra.mxu0 0.0
    %1673 = vmatprep.subr.mxu0 0.0
    %1674 = vmatpush1.msra.mxu0 0.0
    %1675 = vmatprep.subr.mxu0 0.0
    %1676 = vmatpush1.msra.mxu0 0.0
    %1677 = vmatprep.subr.mxu0 0.0
    %1678 = vmatpush1.msra.mxu0 0.0
    %1679 = vmatprep.mubr.f32.mxu0 0.0
    %1680 = vmatmul.mubr.f32.gmra.mrb[0].mxu0 %v1613
    %v1681 = vpop.f32.mrb[0].mxu0
    %v1682 = vadd.f32 %v1609, %v1681
    %v1683 = vpop.f32.mrb[0].mxu0
    %v1684 = vadd.f32 %v1609, %v1683
    %1685 = vdwg.mxu0
    %1686 = vmatprep.subr.mxu0 %v709
    %1687 = vmatpush1.msra.mxu0 %v708
    %1688 = vmatprep.subr.mxu0 %v1605
    %1689 = vmatpush1.msra.mxu0 %v1604
    %1690 = vmatprep.subr.mxu0 0.0
    %1691 = vmatpush1.msra.mxu0 0.0
    %1692 = vmatprep.subr.mxu0 0.0
    %1693 = vmatpush1.msra.mxu0 0.0
    %1694 = vmatprep.subr.mxu0 0.0
    %1695 = vmatpush1.msra.mxu0 0.0
    %1696 = vmatprep.subr.mxu0 0.0
    %1697 = vmatpush1.msra.mxu0 0.0
    %1698 = vmatprep.subr.mxu0 0.0
    %1699 = vmatpush1.msra.mxu0 0.0
    %1700 = vmatprep.subr.mxu0 0.0
    %1701 = vmatpush1.msra.mxu0 0.0
    %1702 = vmatprep.subr.mxu0 0.0
    %1703 = vmatpush1.msra.mxu0 0.0
    %1704 = vmatprep.subr.mxu0 0.0
    %1705 = vmatpush1.msra.mxu0 0.0
    %1706 = vmatprep.subr.mxu0 0.0
    %1707 = vmatpush1.msra.mxu0 0.0
    %1708 = vmatprep.subr.mxu0 0.0
    %1709 = vmatpush1.msra.mxu0 0.0
    %1710 = vmatprep.subr.mxu0 0.0
    %1711 = vmatpush1.msra.mxu0 0.0
    %1712 = vmatprep.subr.mxu0 0.0
    %1713 = vmatpush1.msra.mxu0 0.0
    %1714 = vmatprep.subr.mxu0 0.0
    %1715 = vmatpush1.msra.mxu0 0.0
    %1716 = vmatprep.subr.mxu0 0.0
    %1717 = vmatpush1.msra.mxu0 0.0
    %1718 = vmatprep.subr.mxu0 0.0
    %1719 = vmatpush1.msra.mxu0 0.0
    %1720 = vmatprep.subr.mxu0 0.0
    %1721 = vmatpush1.msra.mxu0 0.0
    %1722 = vmatprep.subr.mxu0 0.0
    %1723 = vmatpush1.msra.mxu0 0.0
    %1724 = vmatprep.subr.mxu0 0.0
    %1725 = vmatpush1.msra.mxu0 0.0
    %1726 = vmatprep.subr.mxu0 0.0
    %1727 = vmatpush1.msra.mxu0 0.0
    %1728 = vmatprep.subr.mxu0 0.0
    %1729 = vmatpush1.msra.mxu0 0.0
    %1730 = vmatprep.subr.mxu0 0.0
    %1731 = vmatpush1.msra.mxu0 0.0
    %1732 = vmatprep.subr.mxu0 0.0
    %1733 = vmatpush1.msra.mxu0 0.0
    %1734 = vmatprep.subr.mxu0 0.0
    %1735 = vmatpush1.msra.mxu0 0.0
    %1736 = vmatprep.subr.mxu0 0.0
    %1737 = vmatpush1.msra.mxu0 0.0
    %1738 = vmatprep.subr.mxu0 0.0
    %1739 = vmatpush1.msra.mxu0 0.0
    %1740 = vmatprep.subr.mxu0 0.0
    %1741 = vmatpush1.msra.mxu0 0.0
    %1742 = vmatprep.subr.mxu0 0.0
    %1743 = vmatpush1.msra.mxu0 0.0
    %1744 = vmatprep.subr.mxu0 0.0
    %1745 = vmatpush1.msra.mxu0 0.0
    %1746 = vmatprep.subr.mxu0 0.0
    %1747 = vmatpush1.msra.mxu0 0.0
    %1748 = vmatprep.subr.mxu0 0.0
    %1749 = vmatpush1.msra.mxu0 0.0
    %1750 = vmatprep.mubr.f32.mxu0 0.0
    %1751 = vmatmul.mubr.f32.gmra.mrb[0].mxu0 %v1613
    %v1752 = vpop.f32.mrb[0].mxu0
    %v1753 = vadd.f32 %v1609, %v1752
    %v1754 = vpop.f32.mrb[0].mxu0
    %v1755 = vadd.f32 %v1609, %v1754
    %1756 = vdwg.mxu0
    %v1757 = vmax.f32 %v1682, 0.0
    %v1758 = vmax.f32 %v1684, 0.0
    %v1759 = vmax.f32 %v1753, 0.0
    %v1760 = vmax.f32 %v1755, 0.0
    %v1765 = vcombine.low %v1757, %v1758
    %v1766 = vcombine.low %v1759, %v1760
    %v1769 = vadd.f32 %v98, %v1765
    %v1770 = vadd.f32 %v99, %v1766
    %1771 = vst [vmem:[#allocation13] sm:$0xff] %v1769
    %1772 = vst [vmem:[#allocation13 + $0x8] sm:$0xff] %v1770
    // Predicated region
    $region50: #{tpu_custom_call.1} parent=1 // pred_check
      _
    $region51: #{tpu_custom_call.1} parent=1 // pred_check_branch
      %1774 = sbr.rel (0) target = $region53
    $region52: #{tpu_custom_call.1} parent=1 // pred_region
      %s1776 = ssub.s32 256, 256
      %1777 = vsyncadd [#allocation4], %s1776
      %s1779 = sshll.u32 [#allocation13], 4
      %s1780 = int_to_ptr.vmem [resolvable:$true] %s1779
      %1782 = dma.vmem_to_hbm [thread:$0]  %s1780, 256, %s6, [#allocation4]
    $region53: #{tpu_custom_call.1} parent=1 // pred_fallthru
      _
    // Predicated region
    $region54: #{tpu_custom_call.1} parent=1 // pred_check
      _
    $region55: #{tpu_custom_call.1} parent=1 // pred_check_branch
      %1784 = sbr.rel (0) target = $region57
    $region56: #{tpu_custom_call.1} parent=1 // pred_region
      %1785 = dma.done [#allocation4], 256
    $region57: #{tpu_custom_call.1} parent=1 // pred_fallthru
      _
    %1786 = vsyncpa [#allocation3], 1
    %1787 = vsyncpa [#allocation6], 1
    %1788 = vsyncpa [#allocation9], 1
    %1789 = vsyncpa [#allocation12], 1
    %1790 = vsyncpa [#allocation4], 1

</llo_original>
